<compile_context>
chip_gen: v7x
topology: tpu7x:2x2x1
jax: 0.10.0
libtpu: 0.0.40
codegen_flags: <defaults>
</compile_context>

<pallas_src>
import math
import functools

import jax
import jax.numpy as jnp
from jax import lax
from jax.experimental import pallas as pl
from jax.experimental.pallas import tpu as pltpu


def fused_block_kernel(x_ref, w_in_ref, b_in_ref, w_out_ref, b_out_ref, o_ref,
                       *, batch, seq_len, embed_dim, num_heads, num_layers):
    """All transformer layers, both batch elements, in one grid step.

    x_ref:     (B, L, E)               VMEM  f32
    w_in_ref:  (num_layers, E, 3E)     VMEM  bf16  (pre-transposed, Q-scaled)
    b_in_ref:  (num_layers, 1, 3E)     VMEM  f32   (Q third pre-scaled)
    w_out_ref: (num_layers, E, E)      VMEM  bf16  (pre-transposed)
    b_out_ref: (num_layers, 1, E)      VMEM  f32
    o_ref:     (B, L, E)               VMEM  f32
    """
    B, L, E, H = batch, seq_len, embed_dim, num_heads
    hd = E // H

    # Fold batch into sublanes: (B, L, E) -> (B*L, E).  Lane dim unchanged and
    # L is a multiple of the sublane tile, so this reshape is free.
    h = x_ref[...].reshape(B * L, E).astype(jnp.float32)

    for layer in range(num_layers):                  # static unroll (2)
        w_in_t = w_in_ref[layer]                     # (E, 3E) bf16, resident
        b_in = b_in_ref[layer]                       # (1, 3E) f32
        w_out_t = w_out_ref[layer]                   # (E, E)  bf16, resident
        b_out = b_out_ref[layer]                     # (1, E)  f32

        # QKV in-projection: one (B*L, E)@(E, 3E) MXU matmul, f32 accumulation.
        # Q scale is already folded into w_in_t / b_in.
        qkv = jnp.dot(h.astype(jnp.bfloat16), w_in_t,
                      preferred_element_type=jnp.float32) + b_in    # (B*L, 3E)

        o_heads = []
        for head in range(H):                        # static unroll (4)
            lo = head * hd
            # Lane slices + free sublane split back to per-batch layout.
            q_h = qkv[:, lo:lo + hd].reshape(B, L, hd).astype(jnp.bfloat16)
            k_h = qkv[:, E + lo:E + lo + hd].reshape(B, L, hd).astype(jnp.bfloat16)
            v_h = qkv[:, 2 * E + lo:2 * E + lo + hd].reshape(B, L, hd).astype(jnp.bfloat16)

            # q @ k^T batched over B (no materialized transpose).
            s = lax.dot_general(q_h, k_h, (((2,), (2,)), ((0,), (0,))),
                                preferred_element_type=jnp.float32)   # (B, L, L)
            # Softmax kept in f32 (v5e VPU/EUP have no bf16 datapath).
            s = s - jnp.max(s, axis=-1, keepdims=True)
            p = jnp.exp(s)
            p = p * pl.reciprocal(jnp.sum(p, axis=-1, keepdims=True),
                                  approx=True)
            o_heads.append(
                lax.dot_general(p.astype(jnp.bfloat16), v_h,
                                (((2,), (1,)), ((0,), (0,))),
                                preferred_element_type=jnp.float32))  # (B, L, hd)

        # Concatenate heads along lanes -> ONE output-projection matmul.
        o_cat = jnp.concatenate(o_heads, axis=-1).reshape(B * L, E)   # (B*L, E)
        h = jnp.dot(o_cat.astype(jnp.bfloat16), w_out_t,
                    preferred_element_type=jnp.float32) + b_out       # (B*L, E)

    o_ref[...] = h.reshape(B, L, E).astype(o_ref.dtype)


def pack_params(params, *, num_heads):
    """One-time layout plumbing (call OUTSIDE the hot path).

    Stacks per-layer weights, pre-transposes to the orientation the kernel
    matmuls consume, folds 1/sqrt(head_dim) into the Q third of the
    in-projection weight and bias, and casts matmul operands to bf16.
    """
    E = params[0][0].shape[1]
    scale = 1.0 / math.sqrt(E // num_heads)
    q_scale = jnp.concatenate(
        [jnp.full((E,), scale, jnp.float32), jnp.ones((2 * E,), jnp.float32)])

    w_in_t, b_in, w_out_t, b_out = [], [], [], []
    for (wi, bi, wo, bo) in params:
        wi = wi.astype(jnp.float32) * q_scale[:, None]    # (3E, E), Q rows scaled
        bi = bi.astype(jnp.float32) * q_scale             # (3E,)
        w_in_t.append(wi.T)                               # (E, 3E)
        b_in.append(bi.reshape(1, 3 * E))
        w_out_t.append(wo.astype(jnp.float32).T)          # (E, E)
        b_out.append(bo.astype(jnp.float32).reshape(1, E))

    return (jnp.stack(w_in_t).astype(jnp.bfloat16),
            jnp.stack(b_in).astype(jnp.float32),
            jnp.stack(w_out_t).astype(jnp.bfloat16),
            jnp.stack(b_out).astype(jnp.float32))


def transformer_block(x, packed, *, num_heads):
    """Fused forward of a stack of self-attention layers (single pallas_call)."""
    B, L, E = x.shape
    w_in_t, b_in, w_out_t, b_out = packed
    num_layers = w_in_t.shape[0]
    assert E % num_heads == 0, "embed_dim must be divisible by num_heads"

    # VMEM-budget guard for the "all layer weights resident" design.
    # v7x has 64 MiB physical (32 MiB default scoped) VMEM.
    weight_bytes = (w_in_t.size + w_out_t.size) * 2 + (b_in.size + b_out.size) * 4
    assert weight_bytes < 8 * 1024 * 1024, (
        "TODO(synk): stream per-layer weights (layer grid axis / emit_pipeline) "
        "and set vmem_limit_bytes once resident weights approach tens of MiB")

    kernel = functools.partial(
        fused_block_kernel, batch=B, seq_len=L, embed_dim=E,
        num_heads=num_heads, num_layers=num_layers)

    return pl.pallas_call(
        kernel,
        out_shape=jax.ShapeDtypeStruct((B, L, E), x.dtype),
        grid_spec=pltpu.PrefetchScalarGridSpec(
            num_scalar_prefetch=0,
            grid=(1,),   # single grid step: batch folded into sublanes in-kernel
            in_specs=[
                pl.BlockSpec((B, L, E), lambda i: (0, 0, 0)),
                pl.BlockSpec((num_layers, E, 3 * E), lambda i: (0, 0, 0)),
                pl.BlockSpec((num_layers, 1, 3 * E), lambda i: (0, 0, 0)),
                pl.BlockSpec((num_layers, E, E), lambda i: (0, 0, 0)),
                pl.BlockSpec((num_layers, 1, E), lambda i: (0, 0, 0)),
            ],
            out_specs=pl.BlockSpec((B, L, E), lambda i: (0, 0, 0)),
        ),
        compiler_params=pltpu.CompilerParams(
            dimension_semantics=("arbitrary",)),
    )(x, w_in_t, b_in, w_out_t, b_out)


def init_params(key, embed_dim, num_layers):
    """Deterministic parameter init mimicking nn.MultiheadAttention shapes (f32)."""
    params = []
    for _ in range(num_layers):
        k1, k2, key = jax.random.split(key, 3)
        bound_in = math.sqrt(6.0 / (3 * embed_dim + embed_dim))   # xavier_uniform
        w_in = jax.random.uniform(k1, (3 * embed_dim, embed_dim),
                                  jnp.float32, -bound_in, bound_in)
        b_in = jnp.zeros((3 * embed_dim,), jnp.float32)
        bound_out = 1.0 / math.sqrt(embed_dim)
        w_out = jax.random.uniform(k2, (embed_dim, embed_dim),
                                   jnp.float32, -bound_out, bound_out)
        b_out = jnp.zeros((embed_dim,), jnp.float32)
        params.append((w_in, b_in, w_out, b_out))
    return params


def reference_block(x, params, *, num_heads):
    """Pure-JAX f32 reference of the same forward pass (unpacked params)."""
    for (w_in, b_in, w_out, b_out) in params:
        B, L, E = x.shape
        hd = E // num_heads
        qkv = jnp.einsum('ble,fe->blf', x, w_in) + b_in          # (B, L, 3E)
        q, k, v = jnp.split(qkv, 3, axis=-1)
        q = q.reshape(B, L, num_heads, hd).transpose(0, 2, 1, 3) / math.sqrt(hd)
        k = k.reshape(B, L, num_heads, hd).transpose(0, 2, 1, 3)
        v = v.reshape(B, L, num_heads, hd).transpose(0, 2, 1, 3)
        s = jnp.einsum('bhqd,bhkd->bhqk', q, k)
        p = jax.nn.softmax(s, axis=-1)
        o = jnp.einsum('bhqk,bhkd->bhqd', p, v)
        o = o.transpose(0, 2, 1, 3).reshape(B, L, E)
        x = jnp.einsum('ble,fe->blf', o, w_out) + b_out
    return x


if __name__ == "__main__":
    B, L, E = 2, 8, 32
    NUM_HEADS = 4
    NUM_LAYERS = 2

    key = jax.random.PRNGKey(0)
    kx, kp = jax.random.split(key)
    x = jax.random.normal(kx, (B, L, E), jnp.float32)
    params = init_params(kp, E, NUM_LAYERS)

    # One-time packing, hoisted out of the hot path.
    packed = jax.tree_util.tree_map(jax.block_until_ready, pack_params(params, num_heads=NUM_HEADS))

    out = transformer_block(x, packed, num_heads=NUM_HEADS)
    out = jax.block_until_ready(out)

    ref = reference_block(x, params, num_heads=NUM_HEADS)
    assert out.shape == (B, L, E)
    # Tolerance relaxed vs. pure-f32: kernel uses bf16 MXU operands (f32
    # accumulation) and approx reciprocal; error compounds with depth.
    assert jnp.allclose(out, ref, atol=5e-2, rtol=5e-2), "mismatch vs reference"

    print("KERNEL_OK")
</pallas_src>

<mosaic_0001>
module attributes {stable_mosaic.version = 11 : i64} {
  func.func @fused_block_kernel(%arg0: i32, %arg1: memref<2x8x32xf32, #tpu.memory_space<vmem>>, %arg2: memref<2x32x96xbf16, #tpu.memory_space<vmem>>, %arg3: memref<2x1x96xf32, #tpu.memory_space<vmem>>, %arg4: memref<2x32x32xbf16, #tpu.memory_space<vmem>>, %arg5: memref<2x1x32xf32, #tpu.memory_space<vmem>>, %arg6: memref<2x8x32xf32, #tpu.memory_space<vmem>>) attributes {dimension_semantics = [#tpu.dimension_semantics<arbitrary>], iteration_bounds = array<i64: 1>, scalar_prefetch = 0 : i64, scratch_operands = 0 : i64, tpu.core_type = #tpu.core_type<tc>, window_params = [{pipeline_mode = #tpu.pipeline_mode<synchronous>, transform_indices = @transform_0, window_bounds = array<i64: 2, 8, 32>}, {pipeline_mode = #tpu.pipeline_mode<synchronous>, transform_indices = @transform_1, window_bounds = array<i64: 2, 32, 96>}, {pipeline_mode = #tpu.pipeline_mode<synchronous>, transform_indices = @transform_2, window_bounds = array<i64: 2, 1, 96>}, {pipeline_mode = #tpu.pipeline_mode<synchronous>, transform_indices = @transform_3, window_bounds = array<i64: 2, 32, 32>}, {pipeline_mode = #tpu.pipeline_mode<synchronous>, transform_indices = @transform_4, window_bounds = array<i64: 2, 1, 32>}, {pipeline_mode = #tpu.pipeline_mode<synchronous>, transform_indices = @transform_5, window_bounds = array<i64: 2, 8, 32>}]} {
    %c0 = arith.constant 0 : index
    %c0_0 = arith.constant 0 : index
    %c0_1 = arith.constant 0 : index
    %0 = vector.load %arg1[%c0, %c0_0, %c0_1] : memref<2x8x32xf32, #tpu.memory_space<vmem>>, vector<2x8x32xf32>
    %1 = vector.shape_cast %0 : vector<2x8x32xf32> to vector<16x32xf32>
    %c0_2 = arith.constant 0 : index
    %c0_3 = arith.constant 0 : index
    %c0_4 = arith.constant 0 : index
    %2 = vector.load %arg2[%c0_2, %c0_3, %c0_4] : memref<2x32x96xbf16, #tpu.memory_space<vmem>>, vector<1x32x96xbf16>
    %3 = vector.shape_cast %2 : vector<1x32x96xbf16> to vector<32x96xbf16>
    %c0_5 = arith.constant 0 : index
    %c0_6 = arith.constant 0 : index
    %c0_7 = arith.constant 0 : index
    %4 = vector.load %arg3[%c0_5, %c0_6, %c0_7] : memref<2x1x96xf32, #tpu.memory_space<vmem>>, vector<1x1x96xf32>
    %5 = vector.shape_cast %4 : vector<1x1x96xf32> to vector<1x96xf32>
    %c0_8 = arith.constant 0 : index
    %c0_9 = arith.constant 0 : index
    %c0_10 = arith.constant 0 : index
    %6 = vector.load %arg4[%c0_8, %c0_9, %c0_10] : memref<2x32x32xbf16, #tpu.memory_space<vmem>>, vector<1x32x32xbf16>
    %7 = vector.shape_cast %6 : vector<1x32x32xbf16> to vector<32x32xbf16>
    %c0_11 = arith.constant 0 : index
    %c0_12 = arith.constant 0 : index
    %c0_13 = arith.constant 0 : index
    %8 = vector.load %arg5[%c0_11, %c0_12, %c0_13] : memref<2x1x32xf32, #tpu.memory_space<vmem>>, vector<1x1x32xf32>
    %9 = vector.shape_cast %8 : vector<1x1x32xf32> to vector<1x32xf32>
    %10 = arith.truncf %1 : vector<16x32xf32> to vector<16x32xbf16>
    %cst = arith.constant dense<0.000000e+00> : vector<16x96xf32>
    %11 = tpu.matmul %10, %3, %cst {dimension_numbers = #tpu.dot_dimension_numbers<[1], [0], [0], [1], [0, 0, 1, 1], [], []>} : vector<16x32xbf16>, vector<32x96xbf16>, vector<16x96xf32> -> vector<16x96xf32>
    %12 = vector.broadcast %5 : vector<1x96xf32> to vector<16x96xf32>
    %13 = arith.addf %11, %12 : vector<16x96xf32>
    %14 = vector.extract_strided_slice %13 {offsets = [0, 0], sizes = [16, 8], strides = [1, 1]} : vector<16x96xf32> to vector<16x8xf32>
    %15 = vector.shape_cast %14 : vector<16x8xf32> to vector<2x8x8xf32>
    %16 = arith.truncf %15 : vector<2x8x8xf32> to vector<2x8x8xbf16>
    %17 = vector.extract_strided_slice %13 {offsets = [0, 32], sizes = [16, 8], strides = [1, 1]} : vector<16x96xf32> to vector<16x8xf32>
    %18 = vector.shape_cast %17 : vector<16x8xf32> to vector<2x8x8xf32>
    %19 = arith.truncf %18 : vector<2x8x8xf32> to vector<2x8x8xbf16>
    %20 = vector.extract_strided_slice %13 {offsets = [0, 64], sizes = [16, 8], strides = [1, 1]} : vector<16x96xf32> to vector<16x8xf32>
    %21 = vector.shape_cast %20 : vector<16x8xf32> to vector<2x8x8xf32>
    %22 = arith.truncf %21 : vector<2x8x8xf32> to vector<2x8x8xbf16>
    %cst_14 = arith.constant dense<0.000000e+00> : vector<2x8x8xf32>
    %23 = tpu.matmul %16, %19, %cst_14 {dimension_numbers = #tpu.dot_dimension_numbers<[2], [2], [1], [1], [0, 0, 0, 1, 1, 1], [0], [0]>} : vector<2x8x8xbf16>, vector<2x8x8xbf16>, vector<2x8x8xf32> -> vector<2x8x8xf32>
    %cst_15 = arith.constant dense<0xFF800000> : vector<2x8xf32>
    %24 = vector.multi_reduction <maximumf>, %23, %cst_15 [2] : vector<2x8x8xf32> to vector<2x8xf32>
    %25 = vector.shape_cast %24 : vector<2x8xf32> to vector<2x8x1xf32>
    %26 = vector.broadcast %25 : vector<2x8x1xf32> to vector<2x8x8xf32>
    %27 = arith.subf %23, %26 : vector<2x8x8xf32>
    %28 = math.exp %27 : vector<2x8x8xf32>
    %cst_16 = arith.constant dense<0.000000e+00> : vector<2x8xf32>
    %29 = vector.multi_reduction <add>, %28, %cst_16 [2] : vector<2x8x8xf32> to vector<2x8xf32>
    %30 = vector.shape_cast %29 : vector<2x8xf32> to vector<2x8x1xf32>
    %31 = tpu.reciprocal %30 {approx = true} : vector<2x8x1xf32> -> vector<2x8x1xf32>
    %32 = vector.broadcast %31 : vector<2x8x1xf32> to vector<2x8x8xf32>
    %33 = arith.mulf %28, %32 : vector<2x8x8xf32>
    %34 = arith.truncf %33 : vector<2x8x8xf32> to vector<2x8x8xbf16>
    %cst_17 = arith.constant dense<0.000000e+00> : vector<2x8x8xf32>
    %35 = tpu.matmul %34, %22, %cst_17 {dimension_numbers = #tpu.dot_dimension_numbers<[2], [1], [1], [2], [0, 0, 0, 1, 1, 2], [0], [0]>} : vector<2x8x8xbf16>, vector<2x8x8xbf16>, vector<2x8x8xf32> -> vector<2x8x8xf32>
    %36 = vector.extract_strided_slice %13 {offsets = [0, 8], sizes = [16, 8], strides = [1, 1]} : vector<16x96xf32> to vector<16x8xf32>
    %37 = vector.shape_cast %36 : vector<16x8xf32> to vector<2x8x8xf32>
    %38 = arith.truncf %37 : vector<2x8x8xf32> to vector<2x8x8xbf16>
    %39 = vector.extract_strided_slice %13 {offsets = [0, 40], sizes = [16, 8], strides = [1, 1]} : vector<16x96xf32> to vector<16x8xf32>
    %40 = vector.shape_cast %39 : vector<16x8xf32> to vector<2x8x8xf32>
    %41 = arith.truncf %40 : vector<2x8x8xf32> to vector<2x8x8xbf16>
    %42 = vector.extract_strided_slice %13 {offsets = [0, 72], sizes = [16, 8], strides = [1, 1]} : vector<16x96xf32> to vector<16x8xf32>
    %43 = vector.shape_cast %42 : vector<16x8xf32> to vector<2x8x8xf32>
    %44 = arith.truncf %43 : vector<2x8x8xf32> to vector<2x8x8xbf16>
    %cst_18 = arith.constant dense<0.000000e+00> : vector<2x8x8xf32>
    %45 = tpu.matmul %38, %41, %cst_18 {dimension_numbers = #tpu.dot_dimension_numbers<[2], [2], [1], [1], [0, 0, 0, 1, 1, 1], [0], [0]>} : vector<2x8x8xbf16>, vector<2x8x8xbf16>, vector<2x8x8xf32> -> vector<2x8x8xf32>
    %cst_19 = arith.constant dense<0xFF800000> : vector<2x8xf32>
    %46 = vector.multi_reduction <maximumf>, %45, %cst_19 [2] : vector<2x8x8xf32> to vector<2x8xf32>
    %47 = vector.shape_cast %46 : vector<2x8xf32> to vector<2x8x1xf32>
    %48 = vector.broadcast %47 : vector<2x8x1xf32> to vector<2x8x8xf32>
    %49 = arith.subf %45, %48 : vector<2x8x8xf32>
    %50 = math.exp %49 : vector<2x8x8xf32>
    %cst_20 = arith.constant dense<0.000000e+00> : vector<2x8xf32>
    %51 = vector.multi_reduction <add>, %50, %cst_20 [2] : vector<2x8x8xf32> to vector<2x8xf32>
    %52 = vector.shape_cast %51 : vector<2x8xf32> to vector<2x8x1xf32>
    %53 = tpu.reciprocal %52 {approx = true} : vector<2x8x1xf32> -> vector<2x8x1xf32>
    %54 = vector.broadcast %53 : vector<2x8x1xf32> to vector<2x8x8xf32>
    %55 = arith.mulf %50, %54 : vector<2x8x8xf32>
    %56 = arith.truncf %55 : vector<2x8x8xf32> to vector<2x8x8xbf16>
    %cst_21 = arith.constant dense<0.000000e+00> : vector<2x8x8xf32>
    %57 = tpu.matmul %56, %44, %cst_21 {dimension_numbers = #tpu.dot_dimension_numbers<[2], [1], [1], [2], [0, 0, 0, 1, 1, 2], [0], [0]>} : vector<2x8x8xbf16>, vector<2x8x8xbf16>, vector<2x8x8xf32> -> vector<2x8x8xf32>
    %58 = vector.extract_strided_slice %13 {offsets = [0, 16], sizes = [16, 8], strides = [1, 1]} : vector<16x96xf32> to vector<16x8xf32>
    %59 = vector.shape_cast %58 : vector<16x8xf32> to vector<2x8x8xf32>
    %60 = arith.truncf %59 : vector<2x8x8xf32> to vector<2x8x8xbf16>
    %61 = vector.extract_strided_slice %13 {offsets = [0, 48], sizes = [16, 8], strides = [1, 1]} : vector<16x96xf32> to vector<16x8xf32>
    %62 = vector.shape_cast %61 : vector<16x8xf32> to vector<2x8x8xf32>
    %63 = arith.truncf %62 : vector<2x8x8xf32> to vector<2x8x8xbf16>
    %64 = vector.extract_strided_slice %13 {offsets = [0, 80], sizes = [16, 8], strides = [1, 1]} : vector<16x96xf32> to vector<16x8xf32>
    %65 = vector.shape_cast %64 : vector<16x8xf32> to vector<2x8x8xf32>
    %66 = arith.truncf %65 : vector<2x8x8xf32> to vector<2x8x8xbf16>
    %cst_22 = arith.constant dense<0.000000e+00> : vector<2x8x8xf32>
    %67 = tpu.matmul %60, %63, %cst_22 {dimension_numbers = #tpu.dot_dimension_numbers<[2], [2], [1], [1], [0, 0, 0, 1, 1, 1], [0], [0]>} : vector<2x8x8xbf16>, vector<2x8x8xbf16>, vector<2x8x8xf32> -> vector<2x8x8xf32>
    %cst_23 = arith.constant dense<0xFF800000> : vector<2x8xf32>
    %68 = vector.multi_reduction <maximumf>, %67, %cst_23 [2] : vector<2x8x8xf32> to vector<2x8xf32>
    %69 = vector.shape_cast %68 : vector<2x8xf32> to vector<2x8x1xf32>
    %70 = vector.broadcast %69 : vector<2x8x1xf32> to vector<2x8x8xf32>
    %71 = arith.subf %67, %70 : vector<2x8x8xf32>
    %72 = math.exp %71 : vector<2x8x8xf32>
    %cst_24 = arith.constant dense<0.000000e+00> : vector<2x8xf32>
    %73 = vector.multi_reduction <add>, %72, %cst_24 [2] : vector<2x8x8xf32> to vector<2x8xf32>
    %74 = vector.shape_cast %73 : vector<2x8xf32> to vector<2x8x1xf32>
    %75 = tpu.reciprocal %74 {approx = true} : vector<2x8x1xf32> -> vector<2x8x1xf32>
    %76 = vector.broadcast %75 : vector<2x8x1xf32> to vector<2x8x8xf32>
    %77 = arith.mulf %72, %76 : vector<2x8x8xf32>
    %78 = arith.truncf %77 : vector<2x8x8xf32> to vector<2x8x8xbf16>
    %cst_25 = arith.constant dense<0.000000e+00> : vector<2x8x8xf32>
    %79 = tpu.matmul %78, %66, %cst_25 {dimension_numbers = #tpu.dot_dimension_numbers<[2], [1], [1], [2], [0, 0, 0, 1, 1, 2], [0], [0]>} : vector<2x8x8xbf16>, vector<2x8x8xbf16>, vector<2x8x8xf32> -> vector<2x8x8xf32>
    %80 = vector.extract_strided_slice %13 {offsets = [0, 24], sizes = [16, 8], strides = [1, 1]} : vector<16x96xf32> to vector<16x8xf32>
    %81 = vector.shape_cast %80 : vector<16x8xf32> to vector<2x8x8xf32>
    %82 = arith.truncf %81 : vector<2x8x8xf32> to vector<2x8x8xbf16>
    %83 = vector.extract_strided_slice %13 {offsets = [0, 56], sizes = [16, 8], strides = [1, 1]} : vector<16x96xf32> to vector<16x8xf32>
    %84 = vector.shape_cast %83 : vector<16x8xf32> to vector<2x8x8xf32>
    %85 = arith.truncf %84 : vector<2x8x8xf32> to vector<2x8x8xbf16>
    %86 = vector.extract_strided_slice %13 {offsets = [0, 88], sizes = [16, 8], strides = [1, 1]} : vector<16x96xf32> to vector<16x8xf32>
    %87 = vector.shape_cast %86 : vector<16x8xf32> to vector<2x8x8xf32>
    %88 = arith.truncf %87 : vector<2x8x8xf32> to vector<2x8x8xbf16>
    %cst_26 = arith.constant dense<0.000000e+00> : vector<2x8x8xf32>
    %89 = tpu.matmul %82, %85, %cst_26 {dimension_numbers = #tpu.dot_dimension_numbers<[2], [2], [1], [1], [0, 0, 0, 1, 1, 1], [0], [0]>} : vector<2x8x8xbf16>, vector<2x8x8xbf16>, vector<2x8x8xf32> -> vector<2x8x8xf32>
    %cst_27 = arith.constant dense<0xFF800000> : vector<2x8xf32>
    %90 = vector.multi_reduction <maximumf>, %89, %cst_27 [2] : vector<2x8x8xf32> to vector<2x8xf32>
    %91 = vector.shape_cast %90 : vector<2x8xf32> to vector<2x8x1xf32>
    %92 = vector.broadcast %91 : vector<2x8x1xf32> to vector<2x8x8xf32>
    %93 = arith.subf %89, %92 : vector<2x8x8xf32>
    %94 = math.exp %93 : vector<2x8x8xf32>
    %cst_28 = arith.constant dense<0.000000e+00> : vector<2x8xf32>
    %95 = vector.multi_reduction <add>, %94, %cst_28 [2] : vector<2x8x8xf32> to vector<2x8xf32>
    %96 = vector.shape_cast %95 : vector<2x8xf32> to vector<2x8x1xf32>
    %97 = tpu.reciprocal %96 {approx = true} : vector<2x8x1xf32> -> vector<2x8x1xf32>
    %98 = vector.broadcast %97 : vector<2x8x1xf32> to vector<2x8x8xf32>
    %99 = arith.mulf %94, %98 : vector<2x8x8xf32>
    %100 = arith.truncf %99 : vector<2x8x8xf32> to vector<2x8x8xbf16>
    %cst_29 = arith.constant dense<0.000000e+00> : vector<2x8x8xf32>
    %101 = tpu.matmul %100, %88, %cst_29 {dimension_numbers = #tpu.dot_dimension_numbers<[2], [1], [1], [2], [0, 0, 0, 1, 1, 2], [0], [0]>} : vector<2x8x8xbf16>, vector<2x8x8xbf16>, vector<2x8x8xf32> -> vector<2x8x8xf32>
    %102 = tpu.concatenate %35, %57, %79, %101 in 2 : vector<2x8x8xf32>, vector<2x8x8xf32>, vector<2x8x8xf32>, vector<2x8x8xf32> -> vector<2x8x32xf32>
    %103 = vector.shape_cast %102 : vector<2x8x32xf32> to vector<16x32xf32>
    %104 = arith.truncf %103 : vector<16x32xf32> to vector<16x32xbf16>
    %cst_30 = arith.constant dense<0.000000e+00> : vector<16x32xf32>
    %105 = tpu.matmul %104, %7, %cst_30 {dimension_numbers = #tpu.dot_dimension_numbers<[1], [0], [0], [1], [0, 0, 1, 1], [], []>} : vector<16x32xbf16>, vector<32x32xbf16>, vector<16x32xf32> -> vector<16x32xf32>
    %106 = vector.broadcast %9 : vector<1x32xf32> to vector<16x32xf32>
    %107 = arith.addf %105, %106 : vector<16x32xf32>
    %c1 = arith.constant 1 : index
    %c0_31 = arith.constant 0 : index
    %c0_32 = arith.constant 0 : index
    %108 = vector.load %arg2[%c1, %c0_31, %c0_32] : memref<2x32x96xbf16, #tpu.memory_space<vmem>>, vector<1x32x96xbf16>
    %109 = vector.shape_cast %108 : vector<1x32x96xbf16> to vector<32x96xbf16>
    %c1_33 = arith.constant 1 : index
    %c0_34 = arith.constant 0 : index
    %c0_35 = arith.constant 0 : index
    %110 = vector.load %arg3[%c1_33, %c0_34, %c0_35] : memref<2x1x96xf32, #tpu.memory_space<vmem>>, vector<1x1x96xf32>
    %111 = vector.shape_cast %110 : vector<1x1x96xf32> to vector<1x96xf32>
    %c1_36 = arith.constant 1 : index
    %c0_37 = arith.constant 0 : index
    %c0_38 = arith.constant 0 : index
    %112 = vector.load %arg4[%c1_36, %c0_37, %c0_38] : memref<2x32x32xbf16, #tpu.memory_space<vmem>>, vector<1x32x32xbf16>
    %113 = vector.shape_cast %112 : vector<1x32x32xbf16> to vector<32x32xbf16>
    %c1_39 = arith.constant 1 : index
    %c0_40 = arith.constant 0 : index
    %c0_41 = arith.constant 0 : index
    %114 = vector.load %arg5[%c1_39, %c0_40, %c0_41] : memref<2x1x32xf32, #tpu.memory_space<vmem>>, vector<1x1x32xf32>
    %115 = vector.shape_cast %114 : vector<1x1x32xf32> to vector<1x32xf32>
    %116 = arith.truncf %107 : vector<16x32xf32> to vector<16x32xbf16>
    %cst_42 = arith.constant dense<0.000000e+00> : vector<16x96xf32>
    %117 = tpu.matmul %116, %109, %cst_42 {dimension_numbers = #tpu.dot_dimension_numbers<[1], [0], [0], [1], [0, 0, 1, 1], [], []>} : vector<16x32xbf16>, vector<32x96xbf16>, vector<16x96xf32> -> vector<16x96xf32>
    %118 = vector.broadcast %111 : vector<1x96xf32> to vector<16x96xf32>
    %119 = arith.addf %117, %118 : vector<16x96xf32>
    %120 = vector.extract_strided_slice %119 {offsets = [0, 0], sizes = [16, 8], strides = [1, 1]} : vector<16x96xf32> to vector<16x8xf32>
    %121 = vector.shape_cast %120 : vector<16x8xf32> to vector<2x8x8xf32>
    %122 = arith.truncf %121 : vector<2x8x8xf32> to vector<2x8x8xbf16>
    %123 = vector.extract_strided_slice %119 {offsets = [0, 32], sizes = [16, 8], strides = [1, 1]} : vector<16x96xf32> to vector<16x8xf32>
    %124 = vector.shape_cast %123 : vector<16x8xf32> to vector<2x8x8xf32>
    %125 = arith.truncf %124 : vector<2x8x8xf32> to vector<2x8x8xbf16>
    %126 = vector.extract_strided_slice %119 {offsets = [0, 64], sizes = [16, 8], strides = [1, 1]} : vector<16x96xf32> to vector<16x8xf32>
    %127 = vector.shape_cast %126 : vector<16x8xf32> to vector<2x8x8xf32>
    %128 = arith.truncf %127 : vector<2x8x8xf32> to vector<2x8x8xbf16>
    %cst_43 = arith.constant dense<0.000000e+00> : vector<2x8x8xf32>
    %129 = tpu.matmul %122, %125, %cst_43 {dimension_numbers = #tpu.dot_dimension_numbers<[2], [2], [1], [1], [0, 0, 0, 1, 1, 1], [0], [0]>} : vector<2x8x8xbf16>, vector<2x8x8xbf16>, vector<2x8x8xf32> -> vector<2x8x8xf32>
    %cst_44 = arith.constant dense<0xFF800000> : vector<2x8xf32>
    %130 = vector.multi_reduction <maximumf>, %129, %cst_44 [2] : vector<2x8x8xf32> to vector<2x8xf32>
    %131 = vector.shape_cast %130 : vector<2x8xf32> to vector<2x8x1xf32>
    %132 = vector.broadcast %131 : vector<2x8x1xf32> to vector<2x8x8xf32>
    %133 = arith.subf %129, %132 : vector<2x8x8xf32>
    %134 = math.exp %133 : vector<2x8x8xf32>
    %cst_45 = arith.constant dense<0.000000e+00> : vector<2x8xf32>
    %135 = vector.multi_reduction <add>, %134, %cst_45 [2] : vector<2x8x8xf32> to vector<2x8xf32>
    %136 = vector.shape_cast %135 : vector<2x8xf32> to vector<2x8x1xf32>
    %137 = tpu.reciprocal %136 {approx = true} : vector<2x8x1xf32> -> vector<2x8x1xf32>
    %138 = vector.broadcast %137 : vector<2x8x1xf32> to vector<2x8x8xf32>
    %139 = arith.mulf %134, %138 : vector<2x8x8xf32>
    %140 = arith.truncf %139 : vector<2x8x8xf32> to vector<2x8x8xbf16>
    %cst_46 = arith.constant dense<0.000000e+00> : vector<2x8x8xf32>
    %141 = tpu.matmul %140, %128, %cst_46 {dimension_numbers = #tpu.dot_dimension_numbers<[2], [1], [1], [2], [0, 0, 0, 1, 1, 2], [0], [0]>} : vector<2x8x8xbf16>, vector<2x8x8xbf16>, vector<2x8x8xf32> -> vector<2x8x8xf32>
    %142 = vector.extract_strided_slice %119 {offsets = [0, 8], sizes = [16, 8], strides = [1, 1]} : vector<16x96xf32> to vector<16x8xf32>
    %143 = vector.shape_cast %142 : vector<16x8xf32> to vector<2x8x8xf32>
    %144 = arith.truncf %143 : vector<2x8x8xf32> to vector<2x8x8xbf16>
    %145 = vector.extract_strided_slice %119 {offsets = [0, 40], sizes = [16, 8], strides = [1, 1]} : vector<16x96xf32> to vector<16x8xf32>
    %146 = vector.shape_cast %145 : vector<16x8xf32> to vector<2x8x8xf32>
    %147 = arith.truncf %146 : vector<2x8x8xf32> to vector<2x8x8xbf16>
    %148 = vector.extract_strided_slice %119 {offsets = [0, 72], sizes = [16, 8], strides = [1, 1]} : vector<16x96xf32> to vector<16x8xf32>
    %149 = vector.shape_cast %148 : vector<16x8xf32> to vector<2x8x8xf32>
    %150 = arith.truncf %149 : vector<2x8x8xf32> to vector<2x8x8xbf16>
    %cst_47 = arith.constant dense<0.000000e+00> : vector<2x8x8xf32>
    %151 = tpu.matmul %144, %147, %cst_47 {dimension_numbers = #tpu.dot_dimension_numbers<[2], [2], [1], [1], [0, 0, 0, 1, 1, 1], [0], [0]>} : vector<2x8x8xbf16>, vector<2x8x8xbf16>, vector<2x8x8xf32> -> vector<2x8x8xf32>
    %cst_48 = arith.constant dense<0xFF800000> : vector<2x8xf32>
    %152 = vector.multi_reduction <maximumf>, %151, %cst_48 [2] : vector<2x8x8xf32> to vector<2x8xf32>
    %153 = vector.shape_cast %152 : vector<2x8xf32> to vector<2x8x1xf32>
    %154 = vector.broadcast %153 : vector<2x8x1xf32> to vector<2x8x8xf32>
    %155 = arith.subf %151, %154 : vector<2x8x8xf32>
    %156 = math.exp %155 : vector<2x8x8xf32>
    %cst_49 = arith.constant dense<0.000000e+00> : vector<2x8xf32>
    %157 = vector.multi_reduction <add>, %156, %cst_49 [2] : vector<2x8x8xf32> to vector<2x8xf32>
    %158 = vector.shape_cast %157 : vector<2x8xf32> to vector<2x8x1xf32>
    %159 = tpu.reciprocal %158 {approx = true} : vector<2x8x1xf32> -> vector<2x8x1xf32>
    %160 = vector.broadcast %159 : vector<2x8x1xf32> to vector<2x8x8xf32>
    %161 = arith.mulf %156, %160 : vector<2x8x8xf32>
    %162 = arith.truncf %161 : vector<2x8x8xf32> to vector<2x8x8xbf16>
    %cst_50 = arith.constant dense<0.000000e+00> : vector<2x8x8xf32>
    %163 = tpu.matmul %162, %150, %cst_50 {dimension_numbers = #tpu.dot_dimension_numbers<[2], [1], [1], [2], [0, 0, 0, 1, 1, 2], [0], [0]>} : vector<2x8x8xbf16>, vector<2x8x8xbf16>, vector<2x8x8xf32> -> vector<2x8x8xf32>
    %164 = vector.extract_strided_slice %119 {offsets = [0, 16], sizes = [16, 8], strides = [1, 1]} : vector<16x96xf32> to vector<16x8xf32>
    %165 = vector.shape_cast %164 : vector<16x8xf32> to vector<2x8x8xf32>
    %166 = arith.truncf %165 : vector<2x8x8xf32> to vector<2x8x8xbf16>
    %167 = vector.extract_strided_slice %119 {offsets = [0, 48], sizes = [16, 8], strides = [1, 1]} : vector<16x96xf32> to vector<16x8xf32>
    %168 = vector.shape_cast %167 : vector<16x8xf32> to vector<2x8x8xf32>
    %169 = arith.truncf %168 : vector<2x8x8xf32> to vector<2x8x8xbf16>
    %170 = vector.extract_strided_slice %119 {offsets = [0, 80], sizes = [16, 8], strides = [1, 1]} : vector<16x96xf32> to vector<16x8xf32>
    %171 = vector.shape_cast %170 : vector<16x8xf32> to vector<2x8x8xf32>
    %172 = arith.truncf %171 : vector<2x8x8xf32> to vector<2x8x8xbf16>
    %cst_51 = arith.constant dense<0.000000e+00> : vector<2x8x8xf32>
    %173 = tpu.matmul %166, %169, %cst_51 {dimension_numbers = #tpu.dot_dimension_numbers<[2], [2], [1], [1], [0, 0, 0, 1, 1, 1], [0], [0]>} : vector<2x8x8xbf16>, vector<2x8x8xbf16>, vector<2x8x8xf32> -> vector<2x8x8xf32>
    %cst_52 = arith.constant dense<0xFF800000> : vector<2x8xf32>
    %174 = vector.multi_reduction <maximumf>, %173, %cst_52 [2] : vector<2x8x8xf32> to vector<2x8xf32>
    %175 = vector.shape_cast %174 : vector<2x8xf32> to vector<2x8x1xf32>
    %176 = vector.broadcast %175 : vector<2x8x1xf32> to vector<2x8x8xf32>
    %177 = arith.subf %173, %176 : vector<2x8x8xf32>
    %178 = math.exp %177 : vector<2x8x8xf32>
    %cst_53 = arith.constant dense<0.000000e+00> : vector<2x8xf32>
    %179 = vector.multi_reduction <add>, %178, %cst_53 [2] : vector<2x8x8xf32> to vector<2x8xf32>
    %180 = vector.shape_cast %179 : vector<2x8xf32> to vector<2x8x1xf32>
    %181 = tpu.reciprocal %180 {approx = true} : vector<2x8x1xf32> -> vector<2x8x1xf32>
    %182 = vector.broadcast %181 : vector<2x8x1xf32> to vector<2x8x8xf32>
    %183 = arith.mulf %178, %182 : vector<2x8x8xf32>
    %184 = arith.truncf %183 : vector<2x8x8xf32> to vector<2x8x8xbf16>
    %cst_54 = arith.constant dense<0.000000e+00> : vector<2x8x8xf32>
    %185 = tpu.matmul %184, %172, %cst_54 {dimension_numbers = #tpu.dot_dimension_numbers<[2], [1], [1], [2], [0, 0, 0, 1, 1, 2], [0], [0]>} : vector<2x8x8xbf16>, vector<2x8x8xbf16>, vector<2x8x8xf32> -> vector<2x8x8xf32>
    %186 = vector.extract_strided_slice %119 {offsets = [0, 24], sizes = [16, 8], strides = [1, 1]} : vector<16x96xf32> to vector<16x8xf32>
    %187 = vector.shape_cast %186 : vector<16x8xf32> to vector<2x8x8xf32>
    %188 = arith.truncf %187 : vector<2x8x8xf32> to vector<2x8x8xbf16>
    %189 = vector.extract_strided_slice %119 {offsets = [0, 56], sizes = [16, 8], strides = [1, 1]} : vector<16x96xf32> to vector<16x8xf32>
    %190 = vector.shape_cast %189 : vector<16x8xf32> to vector<2x8x8xf32>
    %191 = arith.truncf %190 : vector<2x8x8xf32> to vector<2x8x8xbf16>
    %192 = vector.extract_strided_slice %119 {offsets = [0, 88], sizes = [16, 8], strides = [1, 1]} : vector<16x96xf32> to vector<16x8xf32>
    %193 = vector.shape_cast %192 : vector<16x8xf32> to vector<2x8x8xf32>
    %194 = arith.truncf %193 : vector<2x8x8xf32> to vector<2x8x8xbf16>
    %cst_55 = arith.constant dense<0.000000e+00> : vector<2x8x8xf32>
    %195 = tpu.matmul %188, %191, %cst_55 {dimension_numbers = #tpu.dot_dimension_numbers<[2], [2], [1], [1], [0, 0, 0, 1, 1, 1], [0], [0]>} : vector<2x8x8xbf16>, vector<2x8x8xbf16>, vector<2x8x8xf32> -> vector<2x8x8xf32>
    %cst_56 = arith.constant dense<0xFF800000> : vector<2x8xf32>
    %196 = vector.multi_reduction <maximumf>, %195, %cst_56 [2] : vector<2x8x8xf32> to vector<2x8xf32>
    %197 = vector.shape_cast %196 : vector<2x8xf32> to vector<2x8x1xf32>
    %198 = vector.broadcast %197 : vector<2x8x1xf32> to vector<2x8x8xf32>
    %199 = arith.subf %195, %198 : vector<2x8x8xf32>
    %200 = math.exp %199 : vector<2x8x8xf32>
    %cst_57 = arith.constant dense<0.000000e+00> : vector<2x8xf32>
    %201 = vector.multi_reduction <add>, %200, %cst_57 [2] : vector<2x8x8xf32> to vector<2x8xf32>
    %202 = vector.shape_cast %201 : vector<2x8xf32> to vector<2x8x1xf32>
    %203 = tpu.reciprocal %202 {approx = true} : vector<2x8x1xf32> -> vector<2x8x1xf32>
    %204 = vector.broadcast %203 : vector<2x8x1xf32> to vector<2x8x8xf32>
    %205 = arith.mulf %200, %204 : vector<2x8x8xf32>
    %206 = arith.truncf %205 : vector<2x8x8xf32> to vector<2x8x8xbf16>
    %cst_58 = arith.constant dense<0.000000e+00> : vector<2x8x8xf32>
    %207 = tpu.matmul %206, %194, %cst_58 {dimension_numbers = #tpu.dot_dimension_numbers<[2], [1], [1], [2], [0, 0, 0, 1, 1, 2], [0], [0]>} : vector<2x8x8xbf16>, vector<2x8x8xbf16>, vector<2x8x8xf32> -> vector<2x8x8xf32>
    %208 = tpu.concatenate %141, %163, %185, %207 in 2 : vector<2x8x8xf32>, vector<2x8x8xf32>, vector<2x8x8xf32>, vector<2x8x8xf32> -> vector<2x8x32xf32>
    %209 = vector.shape_cast %208 : vector<2x8x32xf32> to vector<16x32xf32>
    %210 = arith.truncf %209 : vector<16x32xf32> to vector<16x32xbf16>
    %cst_59 = arith.constant dense<0.000000e+00> : vector<16x32xf32>
    %211 = tpu.matmul %210, %113, %cst_59 {dimension_numbers = #tpu.dot_dimension_numbers<[1], [0], [0], [1], [0, 0, 1, 1], [], []>} : vector<16x32xbf16>, vector<32x32xbf16>, vector<16x32xf32> -> vector<16x32xf32>
    %212 = vector.broadcast %115 : vector<1x32xf32> to vector<16x32xf32>
    %213 = arith.addf %211, %212 : vector<16x32xf32>
    %214 = vector.shape_cast %213 : vector<16x32xf32> to vector<2x8x32xf32>
    %c0_60 = arith.constant 0 : index
    %c0_61 = arith.constant 0 : index
    %c0_62 = arith.constant 0 : index
    %215 = vector.load %arg6[%c0_60, %c0_61, %c0_62] : memref<2x8x32xf32, #tpu.memory_space<vmem>>, vector<2x8x32xf32>
    tpu.vector_store %arg6[%c0_60, %c0_61, %c0_62], %214 {strides = array<i32>} : memref<2x8x32xf32, #tpu.memory_space<vmem>>, vector<2x8x32xf32>,
    return
  }
  func.func @transform_0(%arg0: i32) -> (i32, i32, i32) {
    %c0_i32 = arith.constant 0 : i32
    %c0_i32_0 = arith.constant 0 : i32
    %c0_i32_1 = arith.constant 0 : i32
    %c0_i32_2 = arith.constant 0 : i32
    return %c0_i32, %c0_i32_0, %c0_i32_1 : i32, i32, i32
  }
  func.func @transform_1(%arg0: i32) -> (i32, i32, i32) {
    %c0_i32 = arith.constant 0 : i32
    %c0_i32_0 = arith.constant 0 : i32
    %c0_i32_1 = arith.constant 0 : i32
    %c0_i32_2 = arith.constant 0 : i32
    return %c0_i32, %c0_i32_0, %c0_i32_1 : i32, i32, i32
  }
  func.func @transform_2(%arg0: i32) -> (i32, i32, i32) {
    %c0_i32 = arith.constant 0 : i32
    %c0_i32_0 = arith.constant 0 : i32
    %c0_i32_1 = arith.constant 0 : i32
    %c0_i32_2 = arith.constant 0 : i32
    return %c0_i32, %c0_i32_0, %c0_i32_1 : i32, i32, i32
  }
  func.func @transform_3(%arg0: i32) -> (i32, i32, i32) {
    %c0_i32 = arith.constant 0 : i32
    %c0_i32_0 = arith.constant 0 : i32
    %c0_i32_1 = arith.constant 0 : i32
    %c0_i32_2 = arith.constant 0 : i32
    return %c0_i32, %c0_i32_0, %c0_i32_1 : i32, i32, i32
  }
  func.func @transform_4(%arg0: i32) -> (i32, i32, i32) {
    %c0_i32 = arith.constant 0 : i32
    %c0_i32_0 = arith.constant 0 : i32
    %c0_i32_1 = arith.constant 0 : i32
    %c0_i32_2 = arith.constant 0 : i32
    return %c0_i32, %c0_i32_0, %c0_i32_1 : i32, i32, i32
  }
  func.func @transform_5(%arg0: i32) -> (i32, i32, i32) {
    %c0_i32 = arith.constant 0 : i32
    %c0_i32_0 = arith.constant 0 : i32
    %c0_i32_1 = arith.constant 0 : i32
    %c0_i32_2 = arith.constant 0 : i32
    return %c0_i32, %c0_i32_0, %c0_i32_1 : i32, i32, i32
  }
}

</mosaic_0001>

<llo_original>
// kernel: tpu_custom_call.1
$region0: #{tpu_custom_call.1}
  #allocation0 [shape = 'u32[]', space=smem, size = 0x4, offset = 0x4, fixed_abs, tag = 'smem constant byte address 0x4 - core index']
  #allocation1 [shape = 'u32[144,128]{1,0:T(1,128)}', space=vmem, size = 0x12000, scoped, tag = 'internal scratch']
  %s0 = inlined_call_operand.hbm [shape: f32[2,8,32], index: 0, kind: input, shape index: {}]
  %s1 = inlined_call_operand.hbm [shape: bf16[2,32,96], index: 1, kind: input, shape index: {}]
  %s2 = inlined_call_operand.vmem [shape: f32[2,1,96], index: 2, kind: input, shape index: {}]
  %s3 = inlined_call_operand.hbm [shape: bf16[2,32,32], index: 3, kind: input, shape index: {}]
  %s4 = inlined_call_operand.vmem [shape: f32[2,1,32], index: 4, kind: input, shape index: {}]
  %s5 = inlined_call_operand.hbm [shape: f32[2,8,32], index: 5, kind: output, shape index: {}]
  %s6 = sld [smem:[#allocation0]]
  $region42: #{tpu_custom_call.1} parent=0
    _
  %s8 = ssub.s32 1, %s6
  %s9 = scalar_select 0, %s8, %s6
  $region1: #{tpu_custom_call.1} parent=0
    #allocation2 [shape = 'u8[8192]{0}', space=vmem, size = 0x2000, scoped, tag = 'input window, operand 0, single buffered']
    #allocation3 [shape = 's32[1]{0}', space=sflag, size = 0x4, scoped, tag = 'scoped memory for tpu_custom_call.1']
    #allocation4 [shape = 's32[1]{0}', space=sflag, size = 0x4, scoped, tag = 'scoped memory for tpu_custom_call.1']
    #allocation5 [shape = 'u8[16384]{0}', space=vmem, size = 0x4000, scoped, tag = 'input window, operand 1, single buffered']
    #allocation6 [shape = 's32[1]{0}', space=sflag, size = 0x4, scoped, tag = 'scoped memory for tpu_custom_call.1']
    #allocation7 [shape = 'u8[16384]{0}', space=vmem, size = 0x4000, scoped, tag = 'input window, operand 3, single buffered']
    #allocation8 [shape = 'u8[8192]{0}', space=vmem, size = 0x2000, scoped, tag = 'output window, operand 0, single buffered']
    %10 = vsyncpa [#allocation3], 0
    %11 = vsyncpa [#allocation6], 0
    %12 = vsyncpa [#allocation4], 0
    // Predicated region
    $region2: #{tpu_custom_call.1} parent=1 // pred_check
      _
    $region3: #{tpu_custom_call.1} parent=1 // pred_check_branch
      %14 = sbr.rel (0) target = $region5
    $region4: #{tpu_custom_call.1} parent=1 // pred_region
      %s16 = ssub.s32 256, 256
      %17 = vsyncadd [#allocation3], %s16
      %s18 = sshll.u32 [#allocation2], 4
      %s19 = int_to_ptr.vmem [resolvable:$true] %s18
      %24 = dma.hbm_to_vmem [thread:$0]  %s0, 256, %s19, [#allocation3], 128, 128, 8
    $region5: #{tpu_custom_call.1} parent=1 // pred_fallthru
      _
    // Predicated region
    $region6: #{tpu_custom_call.1} parent=1 // pred_check
      _
    $region7: #{tpu_custom_call.1} parent=1 // pred_check_branch
      %26 = sbr.rel (0) target = $region9
    $region8: #{tpu_custom_call.1} parent=1 // pred_region
      %s28 = ssub.s32 512, 512
      %29 = vsyncadd [#allocation6], %s28
      %s30 = sshll.u32 [#allocation5], 4
      %s31 = int_to_ptr.vmem [resolvable:$true] %s30
      %36 = dma.hbm_to_vmem [thread:$0]  %s1, 512, %s31, [#allocation6], 64, 64, 4
    $region9: #{tpu_custom_call.1} parent=1 // pred_fallthru
      _
    // Predicated region
    $region10: #{tpu_custom_call.1} parent=1 // pred_check
      _
    $region11: #{tpu_custom_call.1} parent=1 // pred_check_branch
      %38 = sbr.rel (0) target = $region13
    $region12: #{tpu_custom_call.1} parent=1 // pred_region
      _
    $region13: #{tpu_custom_call.1} parent=1 // pred_fallthru
      _
    // Predicated region
    $region14: #{tpu_custom_call.1} parent=1 // pred_check
      _
    $region15: #{tpu_custom_call.1} parent=1 // pred_check_branch
      %40 = sbr.rel (0) target = $region17
    $region16: #{tpu_custom_call.1} parent=1 // pred_region
      %s42 = ssub.s32 512, 512
      %43 = vsyncadd [#allocation6], %s42
      %s44 = sshll.u32 [#allocation7], 4
      %s45 = int_to_ptr.vmem [resolvable:$true] %s44
      %50 = dma.hbm_to_vmem [thread:$0]  %s3, 512, %s45, [#allocation6], 64, 64, 4
    $region17: #{tpu_custom_call.1} parent=1 // pred_fallthru
      _
    // Predicated region
    $region18: #{tpu_custom_call.1} parent=1 // pred_check
      _
    $region19: #{tpu_custom_call.1} parent=1 // pred_check_branch
      %52 = sbr.rel (0) target = $region21
    $region20: #{tpu_custom_call.1} parent=1 // pred_region
      _
    $region21: #{tpu_custom_call.1} parent=1 // pred_fallthru
      _
    // Predicated region
    $region22: #{tpu_custom_call.1} parent=1 // pred_check
      _
    $region23: #{tpu_custom_call.1} parent=1 // pred_check_branch
      %54 = sbr.rel (0) target = $region25
    $region24: #{tpu_custom_call.1} parent=1 // pred_region
      %55 = dma.done [#allocation3], 256
    $region25: #{tpu_custom_call.1} parent=1 // pred_fallthru
      _
    // Predicated region
    $region26: #{tpu_custom_call.1} parent=1 // pred_check
      _
    $region27: #{tpu_custom_call.1} parent=1 // pred_check_branch
      %57 = sbr.rel (0) target = $region29
    $region28: #{tpu_custom_call.1} parent=1 // pred_region
      %58 = dma.done [#allocation6], 512
    $region29: #{tpu_custom_call.1} parent=1 // pred_fallthru
      _
    // Predicated region
    $region30: #{tpu_custom_call.1} parent=1 // pred_check
      _
    $region31: #{tpu_custom_call.1} parent=1 // pred_check_branch
      %60 = sbr.rel (0) target = $region33
    $region32: #{tpu_custom_call.1} parent=1 // pred_region
      %61 = dma.done [#allocation6], 512
    $region33: #{tpu_custom_call.1} parent=1 // pred_fallthru
      _
    %v63 = vld [vmem:[#allocation2] sm:$0xff]
    %v64 = vld [vmem:[#allocation2 + $0x8] sm:$0xff]
    %v65 = vld [vmem:[#allocation5] sm:$0xf]
    %v66 = vld [vmem:[#allocation5 + $0x4] sm:$0xf]
    %v67 = vld [vmem:[#allocation5 + $0x8] sm:$0xf]
    %v68 = vld [vmem:[#allocation5 + $0xc] sm:$0xf]
    %v69 = vld [vmem:[%s2] sm:$0x1]
    %v70 = vld [vmem:[#allocation7] sm:$0xf]
    %v71 = vld [vmem:[#allocation7 + $0x4] sm:$0xf]
    %v72 = vld [vmem:[#allocation7 + $0x8] sm:$0xf]
    %v73 = vld [vmem:[#allocation7 + $0xc] sm:$0xf]
    %v74 = vld [vmem:[%s4] sm:$0x1]
    %v75 = vpack.c.bf16 %v64, %v63
    %v77 = vlaneseq
    %v78 = vshrl.u32 %v77, 7
    %v79 = vsub.s32 0, %v78
    %v80 = vrot.slane %v69, %v79
    %v86 = vunpack.c.l.b16 %v65
    %v87 = vunpack.c.l.b16 %v66
    %v88 = vunpack.c.l.b16 %v67
    %v89 = vunpack.c.l.b16 %v68
    %v90 = vpack.c.b16 %v87, %v86
    %v91 = vpack.c.b16 %v89, %v88
    %vm94 = vcmask 261120
    %v96 = vsel %vm94, %v75, 0
    %98 = vmatprep.subr.bf16.mxu0 0
    %99 = vmatpush1.bf16.msra.mxu0 %v90
    %100 = vmatprep.subr.bf16.mxu0 0
    %101 = vmatpush1.bf16.msra.mxu0 %v91
    %102 = vmatprep.subr.bf16.mxu0 0
    %103 = vmatpush1.bf16.msra.mxu0 0
    %104 = vmatprep.subr.bf16.mxu0 0
    %105 = vmatpush1.bf16.msra.mxu0 0
    %106 = vmatprep.subr.bf16.mxu0 0
    %107 = vmatpush1.bf16.msra.mxu0 0
    %108 = vmatprep.subr.bf16.mxu0 0
    %109 = vmatpush1.bf16.msra.mxu0 0
    %110 = vmatprep.subr.bf16.mxu0 0
    %111 = vmatpush1.bf16.msra.mxu0 0
    %112 = vmatprep.subr.bf16.mxu0 0
    %113 = vmatpush1.bf16.msra.mxu0 0
    %114 = vmatprep.subr.bf16.mxu0 0
    %115 = vmatpush1.bf16.msra.mxu0 0
    %116 = vmatprep.subr.bf16.mxu0 0
    %117 = vmatpush1.bf16.msra.mxu0 0
    %118 = vmatprep.subr.bf16.mxu0 0
    %119 = vmatpush1.bf16.msra.mxu0 0
    %120 = vmatprep.subr.bf16.mxu0 0
    %121 = vmatpush1.bf16.msra.mxu0 0
    %122 = vmatprep.subr.bf16.mxu0 0
    %123 = vmatpush1.bf16.msra.mxu0 0
    %124 = vmatprep.subr.bf16.mxu0 0
    %125 = vmatpush1.bf16.msra.mxu0 0
    %126 = vmatprep.subr.bf16.mxu0 0
    %127 = vmatpush1.bf16.msra.mxu0 0
    %128 = vmatprep.subr.bf16.mxu0 0
    %129 = vmatpush1.bf16.msra.mxu0 0
    %130 = vmatprep.mubr.bf16.mxu0 0
    %131 = vmatmul.mubr.bf16.gmra.mrb[0].mxu0 %v96
    %v132 = vpop.f32.mrb[0].mxu0
    %v133 = vadd.f32 %v80, %v132
    %v134 = vpop.f32.mrb[0].mxu0
    %v135 = vpop.f32.mrb[0].mxu0
    %v136 = vadd.f32 %v80, %v135
    %v137 = vpop.f32.mrb[0].mxu0
    %138 = vdwg.mxu0
    %v139 = vpack.c.bf16 %v133, %v133
    %v140 = vpack.c.bf16 %v136, %v136
    %142 = vrot.lane.b32.xlu0 %v139, 96
    %v143 = vpop.permute.xlu0 %142
    %vm144 = vcmask 64512
    %v146 = vsel %vm144, %v139, 0
    %v149 = vsel %vm144, %v143, 0
    %151 = vmatprep.subr.bf16.mxu0 0
    %152 = vmatpush1.bf16.xpose.msra.mxu0 %v149
    %153 = vmatprep.subr.bf16.mxu0 0
    %154 = vmatpush1.bf16.xpose.msra.mxu0 0
    %155 = vmatprep.subr.bf16.mxu0 0
    %156 = vmatpush1.bf16.xpose.msra.mxu0 0
    %157 = vmatprep.subr.bf16.mxu0 0
    %158 = vmatpush1.bf16.xpose.msra.mxu0 0
    %159 = vmatprep.subr.bf16.mxu0 0
    %160 = vmatpush1.bf16.xpose.msra.mxu0 0
    %161 = vmatprep.subr.bf16.mxu0 0
    %162 = vmatpush1.bf16.xpose.msra.mxu0 0
    %163 = vmatprep.subr.bf16.mxu0 0
    %164 = vmatpush1.bf16.xpose.msra.mxu0 0
    %165 = vmatprep.subr.bf16.mxu0 0
    %166 = vmatpush1.bf16.xpose.msra.mxu0 0
    %167 = vmatprep.subr.bf16.mxu0 0
    %168 = vmatpush1.bf16.xpose.msra.mxu0 0
    %169 = vmatprep.subr.bf16.mxu0 0
    %170 = vmatpush1.bf16.xpose.msra.mxu0 0
    %171 = vmatprep.subr.bf16.mxu0 0
    %172 = vmatpush1.bf16.xpose.msra.mxu0 0
    %173 = vmatprep.subr.bf16.mxu0 0
    %174 = vmatpush1.bf16.xpose.msra.mxu0 0
    %175 = vmatprep.subr.bf16.mxu0 0
    %176 = vmatpush1.bf16.xpose.msra.mxu0 0
    %177 = vmatprep.subr.bf16.mxu0 0
    %178 = vmatpush1.bf16.xpose.msra.mxu0 0
    %179 = vmatprep.subr.bf16.mxu0 0
    %180 = vmatpush1.bf16.xpose.msra.mxu0 0
    %181 = vmatprep.subr.bf16.mxu0 0
    %182 = vmatpush1.bf16.xpose.msra.mxu0 0
    %183 = vmatprep.mubr.bf16.mxu0 0
    %184 = vmatmul.mubr.bf16.gmra.mrb[0].mxu0 %v146
    %v185 = vpop.f32.mrb[0].mxu0
    %v186 = vadd.f32 0.0, %v185
    %v187 = vpop.f32.mrb[0].mxu0
    %v188 = vpop.f32.mrb[0].mxu0
    %v189 = vpop.f32.mrb[0].mxu0
    %190 = vdwg.mxu0
    %192 = vrot.lane.b32.xlu0 %v140, 96
    %v193 = vpop.permute.xlu0 %192
    %v195 = vsel %vm144, %v140, 0
    %v198 = vsel %vm144, %v193, 0
    %200 = vmatprep.subr.bf16.mxu0 0
    %201 = vmatpush1.bf16.xpose.msra.mxu0 %v198
    %202 = vmatprep.subr.bf16.mxu0 0
    %203 = vmatpush1.bf16.xpose.msra.mxu0 0
    %204 = vmatprep.subr.bf16.mxu0 0
    %205 = vmatpush1.bf16.xpose.msra.mxu0 0
    %206 = vmatprep.subr.bf16.mxu0 0
    %207 = vmatpush1.bf16.xpose.msra.mxu0 0
    %208 = vmatprep.subr.bf16.mxu0 0
    %209 = vmatpush1.bf16.xpose.msra.mxu0 0
    %210 = vmatprep.subr.bf16.mxu0 0
    %211 = vmatpush1.bf16.xpose.msra.mxu0 0
    %212 = vmatprep.subr.bf16.mxu0 0
    %213 = vmatpush1.bf16.xpose.msra.mxu0 0
    %214 = vmatprep.subr.bf16.mxu0 0
    %215 = vmatpush1.bf16.xpose.msra.mxu0 0
    %216 = vmatprep.subr.bf16.mxu0 0
    %217 = vmatpush1.bf16.xpose.msra.mxu0 0
    %218 = vmatprep.subr.bf16.mxu0 0
    %219 = vmatpush1.bf16.xpose.msra.mxu0 0
    %220 = vmatprep.subr.bf16.mxu0 0
    %221 = vmatpush1.bf16.xpose.msra.mxu0 0
    %222 = vmatprep.subr.bf16.mxu0 0
    %223 = vmatpush1.bf16.xpose.msra.mxu0 0
    %224 = vmatprep.subr.bf16.mxu0 0
    %225 = vmatpush1.bf16.xpose.msra.mxu0 0
    %226 = vmatprep.subr.bf16.mxu0 0
    %227 = vmatpush1.bf16.xpose.msra.mxu0 0
    %228 = vmatprep.subr.bf16.mxu0 0
    %229 = vmatpush1.bf16.xpose.msra.mxu0 0
    %230 = vmatprep.subr.bf16.mxu0 0
    %231 = vmatpush1.bf16.xpose.msra.mxu0 0
    %232 = vmatprep.mubr.bf16.mxu0 0
    %233 = vmatmul.mubr.bf16.gmra.mrb[0].mxu0 %v195
    %v234 = vpop.f32.mrb[0].mxu0
    %v235 = vadd.f32 0.0, %v234
    %v236 = vpop.f32.mrb[0].mxu0
    %v237 = vpop.f32.mrb[0].mxu0
    %v238 = vpop.f32.mrb[0].mxu0
    %239 = vdwg.mxu0
    %v240 = vsel %vm144, %v186, -inf
    %241 = vmax.xlane.f32.xlu0 %v240
    %v242 = vpop.xlane.xlu0 %241
    %v243 = vsel %vm144, %v235, -inf
    %244 = vmax.xlane.f32.xlu0 %v243
    %v245 = vpop.xlane.xlu0 %244
    %v246 = vsub.f32 %v186, %v242
    %v247 = vsub.f32 %v235, %v245
    %v248 = vmul.f32 %v246, 1.442695
    %v249 = vpow.pop %v248
    %v250 = vmul.f32 %v247, 1.442695
    %v251 = vpow.pop %v250
    %v252 = vsel %vm144, %v249, 0.0
    %253 = vadd.xlane.f32.xlu0 %v252
    %v254 = vpop.xlane.xlu0 %253
    %v255 = vsel %vm144, %v251, 0.0
    %256 = vadd.xlane.f32.xlu0 %v255
    %v257 = vpop.xlane.xlu0 %256
    %v258 = vrcp.pop %v254
    %v259 = vrcp.pop %v257
    %v260 = vmul.f32 %v249, %v258
    %v261 = vmul.f32 %v251, %v259
    %v262 = vpack.c.bf16 %v260, %v260
    %v263 = vpack.c.bf16 %v261, %v261
    %264 = vrot.lane.b32.xlu0 %v139, 64
    %v265 = vpop.permute.xlu0 %264
    %v267 = vsel %vm144, %v262, 0
    %vm269 = vcmask 1043456
    %v271 = vsel %vm269, %v265, 0
    %273 = vmatprep.subr.bf16.mxu0 0
    %274 = vmatpush1.bf16.msra.mxu0 %v271
    %275 = vmatprep.subr.bf16.mxu0 0
    %276 = vmatpush1.bf16.msra.mxu0 0
    %277 = vmatprep.subr.bf16.mxu0 0
    %278 = vmatpush1.bf16.msra.mxu0 0
    %279 = vmatprep.subr.bf16.mxu0 0
    %280 = vmatpush1.bf16.msra.mxu0 0
    %281 = vmatprep.subr.bf16.mxu0 0
    %282 = vmatpush1.bf16.msra.mxu0 0
    %283 = vmatprep.subr.bf16.mxu0 0
    %284 = vmatpush1.bf16.msra.mxu0 0
    %285 = vmatprep.subr.bf16.mxu0 0
    %286 = vmatpush1.bf16.msra.mxu0 0
    %287 = vmatprep.subr.bf16.mxu0 0
    %288 = vmatpush1.bf16.msra.mxu0 0
    %289 = vmatprep.subr.bf16.mxu0 0
    %290 = vmatpush1.bf16.msra.mxu0 0
    %291 = vmatprep.subr.bf16.mxu0 0
    %292 = vmatpush1.bf16.msra.mxu0 0
    %293 = vmatprep.subr.bf16.mxu0 0
    %294 = vmatpush1.bf16.msra.mxu0 0
    %295 = vmatprep.subr.bf16.mxu0 0
    %296 = vmatpush1.bf16.msra.mxu0 0
    %297 = vmatprep.subr.bf16.mxu0 0
    %298 = vmatpush1.bf16.msra.mxu0 0
    %299 = vmatprep.subr.bf16.mxu0 0
    %300 = vmatpush1.bf16.msra.mxu0 0
    %301 = vmatprep.subr.bf16.mxu0 0
    %302 = vmatpush1.bf16.msra.mxu0 0
    %303 = vmatprep.subr.bf16.mxu0 0
    %304 = vmatpush1.bf16.msra.mxu0 0
    %305 = vmatprep.mubr.bf16.mxu0 0
    %306 = vmatmul.mubr.bf16.gmra.mrb[0].mxu0 %v267
    %v307 = vpop.f32.mrb[0].mxu0
    %v308 = vadd.f32 0.0, %v307
    %v309 = vpop.f32.mrb[0].mxu0
    %v310 = vpop.f32.mrb[0].mxu0
    %v311 = vpop.f32.mrb[0].mxu0
    %312 = vdwg.mxu0
    %313 = vrot.lane.b32.xlu0 %v140, 64
    %v314 = vpop.permute.xlu0 %313
    %v316 = vsel %vm144, %v263, 0
    %v319 = vsel %vm269, %v314, 0
    %321 = vmatprep.subr.bf16.mxu0 0
    %322 = vmatpush1.bf16.msra.mxu0 %v319
    %323 = vmatprep.subr.bf16.mxu0 0
    %324 = vmatpush1.bf16.msra.mxu0 0
    %325 = vmatprep.subr.bf16.mxu0 0
    %326 = vmatpush1.bf16.msra.mxu0 0
    %327 = vmatprep.subr.bf16.mxu0 0
    %328 = vmatpush1.bf16.msra.mxu0 0
    %329 = vmatprep.subr.bf16.mxu0 0
    %330 = vmatpush1.bf16.msra.mxu0 0
    %331 = vmatprep.subr.bf16.mxu0 0
    %332 = vmatpush1.bf16.msra.mxu0 0
    %333 = vmatprep.subr.bf16.mxu0 0
    %334 = vmatpush1.bf16.msra.mxu0 0
    %335 = vmatprep.subr.bf16.mxu0 0
    %336 = vmatpush1.bf16.msra.mxu0 0
    %337 = vmatprep.subr.bf16.mxu0 0
    %338 = vmatpush1.bf16.msra.mxu0 0
    %339 = vmatprep.subr.bf16.mxu0 0
    %340 = vmatpush1.bf16.msra.mxu0 0
    %341 = vmatprep.subr.bf16.mxu0 0
    %342 = vmatpush1.bf16.msra.mxu0 0
    %343 = vmatprep.subr.bf16.mxu0 0
    %344 = vmatpush1.bf16.msra.mxu0 0
    %345 = vmatprep.subr.bf16.mxu0 0
    %346 = vmatpush1.bf16.msra.mxu0 0
    %347 = vmatprep.subr.bf16.mxu0 0
    %348 = vmatpush1.bf16.msra.mxu0 0
    %349 = vmatprep.subr.bf16.mxu0 0
    %350 = vmatpush1.bf16.msra.mxu0 0
    %351 = vmatprep.subr.bf16.mxu0 0
    %352 = vmatpush1.bf16.msra.mxu0 0
    %353 = vmatprep.mubr.bf16.mxu0 0
    %354 = vmatmul.mubr.bf16.gmra.mrb[0].mxu0 %v316
    %v355 = vpop.f32.mrb[0].mxu0
    %v356 = vadd.f32 0.0, %v355
    %v357 = vpop.f32.mrb[0].mxu0
    %v358 = vpop.f32.mrb[0].mxu0
    %v359 = vpop.f32.mrb[0].mxu0
    %360 = vdwg.mxu0
    %361 = vrot.lane.b32.xlu0 %v139, 120
    %v362 = vpop.permute.xlu0 %361
    %363 = vrot.lane.b32.xlu0 %v139, 88
    %v364 = vpop.permute.xlu0 %363
    %v366 = vsel %vm144, %v362, 0
    %v369 = vsel %vm144, %v364, 0
    %371 = vmatprep.subr.bf16.mxu0 0
    %372 = vmatpush1.bf16.xpose.msra.mxu0 %v369
    %373 = vmatprep.subr.bf16.mxu0 0
    %374 = vmatpush1.bf16.xpose.msra.mxu0 0
    %375 = vmatprep.subr.bf16.mxu0 0
    %376 = vmatpush1.bf16.xpose.msra.mxu0 0
    %377 = vmatprep.subr.bf16.mxu0 0
    %378 = vmatpush1.bf16.xpose.msra.mxu0 0
    %379 = vmatprep.subr.bf16.mxu0 0
    %380 = vmatpush1.bf16.xpose.msra.mxu0 0
    %381 = vmatprep.subr.bf16.mxu0 0
    %382 = vmatpush1.bf16.xpose.msra.mxu0 0
    %383 = vmatprep.subr.bf16.mxu0 0
    %384 = vmatpush1.bf16.xpose.msra.mxu0 0
    %385 = vmatprep.subr.bf16.mxu0 0
    %386 = vmatpush1.bf16.xpose.msra.mxu0 0
    %387 = vmatprep.subr.bf16.mxu0 0
    %388 = vmatpush1.bf16.xpose.msra.mxu0 0
    %389 = vmatprep.subr.bf16.mxu0 0
    %390 = vmatpush1.bf16.xpose.msra.mxu0 0
    %391 = vmatprep.subr.bf16.mxu0 0
    %392 = vmatpush1.bf16.xpose.msra.mxu0 0
    %393 = vmatprep.subr.bf16.mxu0 0
    %394 = vmatpush1.bf16.xpose.msra.mxu0 0
    %395 = vmatprep.subr.bf16.mxu0 0
    %396 = vmatpush1.bf16.xpose.msra.mxu0 0
    %397 = vmatprep.subr.bf16.mxu0 0
    %398 = vmatpush1.bf16.xpose.msra.mxu0 0
    %399 = vmatprep.subr.bf16.mxu0 0
    %400 = vmatpush1.bf16.xpose.msra.mxu0 0
    %401 = vmatprep.subr.bf16.mxu0 0
    %402 = vmatpush1.bf16.xpose.msra.mxu0 0
    %403 = vmatprep.mubr.bf16.mxu0 0
    %404 = vmatmul.mubr.bf16.gmra.mrb[0].mxu0 %v366
    %v405 = vpop.f32.mrb[0].mxu0
    %v406 = vadd.f32 0.0, %v405
    %v407 = vpop.f32.mrb[0].mxu0
    %v408 = vpop.f32.mrb[0].mxu0
    %v409 = vpop.f32.mrb[0].mxu0
    %410 = vdwg.mxu0
    %411 = vrot.lane.b32.xlu0 %v140, 120
    %v412 = vpop.permute.xlu0 %411
    %413 = vrot.lane.b32.xlu0 %v140, 88
    %v414 = vpop.permute.xlu0 %413
    %v416 = vsel %vm144, %v412, 0
    %v419 = vsel %vm144, %v414, 0
    %421 = vmatprep.subr.bf16.mxu0 0
    %422 = vmatpush1.bf16.xpose.msra.mxu0 %v419
    %423 = vmatprep.subr.bf16.mxu0 0
    %424 = vmatpush1.bf16.xpose.msra.mxu0 0
    %425 = vmatprep.subr.bf16.mxu0 0
    %426 = vmatpush1.bf16.xpose.msra.mxu0 0
    %427 = vmatprep.subr.bf16.mxu0 0
    %428 = vmatpush1.bf16.xpose.msra.mxu0 0
    %429 = vmatprep.subr.bf16.mxu0 0
    %430 = vmatpush1.bf16.xpose.msra.mxu0 0
    %431 = vmatprep.subr.bf16.mxu0 0
    %432 = vmatpush1.bf16.xpose.msra.mxu0 0
    %433 = vmatprep.subr.bf16.mxu0 0
    %434 = vmatpush1.bf16.xpose.msra.mxu0 0
    %435 = vmatprep.subr.bf16.mxu0 0
    %436 = vmatpush1.bf16.xpose.msra.mxu0 0
    %437 = vmatprep.subr.bf16.mxu0 0
    %438 = vmatpush1.bf16.xpose.msra.mxu0 0
    %439 = vmatprep.subr.bf16.mxu0 0
    %440 = vmatpush1.bf16.xpose.msra.mxu0 0
    %441 = vmatprep.subr.bf16.mxu0 0
    %442 = vmatpush1.bf16.xpose.msra.mxu0 0
    %443 = vmatprep.subr.bf16.mxu0 0
    %444 = vmatpush1.bf16.xpose.msra.mxu0 0
    %445 = vmatprep.subr.bf16.mxu0 0
    %446 = vmatpush1.bf16.xpose.msra.mxu0 0
    %447 = vmatprep.subr.bf16.mxu0 0
    %448 = vmatpush1.bf16.xpose.msra.mxu0 0
    %449 = vmatprep.subr.bf16.mxu0 0
    %450 = vmatpush1.bf16.xpose.msra.mxu0 0
    %451 = vmatprep.subr.bf16.mxu0 0
    %452 = vmatpush1.bf16.xpose.msra.mxu0 0
    %453 = vmatprep.mubr.bf16.mxu0 0
    %454 = vmatmul.mubr.bf16.gmra.mrb[0].mxu0 %v416
    %v455 = vpop.f32.mrb[0].mxu0
    %v456 = vadd.f32 0.0, %v455
    %v457 = vpop.f32.mrb[0].mxu0
    %v458 = vpop.f32.mrb[0].mxu0
    %v459 = vpop.f32.mrb[0].mxu0
    %460 = vdwg.mxu0
    %v461 = vsel %vm144, %v406, -inf
    %462 = vmax.xlane.f32.xlu0 %v461
    %v463 = vpop.xlane.xlu0 %462
    %v464 = vsel %vm144, %v456, -inf
    %465 = vmax.xlane.f32.xlu0 %v464
    %v466 = vpop.xlane.xlu0 %465
    %v467 = vsub.f32 %v406, %v463
    %v468 = vsub.f32 %v456, %v466
    %v469 = vmul.f32 %v467, 1.442695
    %v470 = vpow.pop %v469
    %v471 = vmul.f32 %v468, 1.442695
    %v472 = vpow.pop %v471
    %v473 = vsel %vm144, %v470, 0.0
    %474 = vadd.xlane.f32.xlu0 %v473
    %v475 = vpop.xlane.xlu0 %474
    %v476 = vsel %vm144, %v472, 0.0
    %477 = vadd.xlane.f32.xlu0 %v476
    %v478 = vpop.xlane.xlu0 %477
    %v479 = vrcp.pop %v475
    %v480 = vrcp.pop %v478
    %v481 = vmul.f32 %v470, %v479
    %v482 = vmul.f32 %v472, %v480
    %v483 = vpack.c.bf16 %v481, %v481
    %v484 = vpack.c.bf16 %v482, %v482
    %485 = vrot.lane.b32.xlu0 %v139, 56
    %v486 = vpop.permute.xlu0 %485
    %v488 = vsel %vm144, %v483, 0
    %v491 = vsel %vm269, %v486, 0
    %493 = vmatprep.subr.bf16.mxu0 0
    %494 = vmatpush1.bf16.msra.mxu0 %v491
    %495 = vmatprep.subr.bf16.mxu0 0
    %496 = vmatpush1.bf16.msra.mxu0 0
    %497 = vmatprep.subr.bf16.mxu0 0
    %498 = vmatpush1.bf16.msra.mxu0 0
    %499 = vmatprep.subr.bf16.mxu0 0
    %500 = vmatpush1.bf16.msra.mxu0 0
    %501 = vmatprep.subr.bf16.mxu0 0
    %502 = vmatpush1.bf16.msra.mxu0 0
    %503 = vmatprep.subr.bf16.mxu0 0
    %504 = vmatpush1.bf16.msra.mxu0 0
    %505 = vmatprep.subr.bf16.mxu0 0
    %506 = vmatpush1.bf16.msra.mxu0 0
    %507 = vmatprep.subr.bf16.mxu0 0
    %508 = vmatpush1.bf16.msra.mxu0 0
    %509 = vmatprep.subr.bf16.mxu0 0
    %510 = vmatpush1.bf16.msra.mxu0 0
    %511 = vmatprep.subr.bf16.mxu0 0
    %512 = vmatpush1.bf16.msra.mxu0 0
    %513 = vmatprep.subr.bf16.mxu0 0
    %514 = vmatpush1.bf16.msra.mxu0 0
    %515 = vmatprep.subr.bf16.mxu0 0
    %516 = vmatpush1.bf16.msra.mxu0 0
    %517 = vmatprep.subr.bf16.mxu0 0
    %518 = vmatpush1.bf16.msra.mxu0 0
    %519 = vmatprep.subr.bf16.mxu0 0
    %520 = vmatpush1.bf16.msra.mxu0 0
    %521 = vmatprep.subr.bf16.mxu0 0
    %522 = vmatpush1.bf16.msra.mxu0 0
    %523 = vmatprep.subr.bf16.mxu0 0
    %524 = vmatpush1.bf16.msra.mxu0 0
    %525 = vmatprep.mubr.bf16.mxu0 0
    %526 = vmatmul.mubr.bf16.gmra.mrb[0].mxu0 %v488
    %v527 = vpop.f32.mrb[0].mxu0
    %v528 = vadd.f32 0.0, %v527
    %v529 = vpop.f32.mrb[0].mxu0
    %v530 = vpop.f32.mrb[0].mxu0
    %v531 = vpop.f32.mrb[0].mxu0
    %532 = vdwg.mxu0
    %533 = vrot.lane.b32.xlu0 %v140, 56
    %v534 = vpop.permute.xlu0 %533
    %v536 = vsel %vm144, %v484, 0
    %v539 = vsel %vm269, %v534, 0
    %541 = vmatprep.subr.bf16.mxu0 0
    %542 = vmatpush1.bf16.msra.mxu0 %v539
    %543 = vmatprep.subr.bf16.mxu0 0
    %544 = vmatpush1.bf16.msra.mxu0 0
    %545 = vmatprep.subr.bf16.mxu0 0
    %546 = vmatpush1.bf16.msra.mxu0 0
    %547 = vmatprep.subr.bf16.mxu0 0
    %548 = vmatpush1.bf16.msra.mxu0 0
    %549 = vmatprep.subr.bf16.mxu0 0
    %550 = vmatpush1.bf16.msra.mxu0 0
    %551 = vmatprep.subr.bf16.mxu0 0
    %552 = vmatpush1.bf16.msra.mxu0 0
    %553 = vmatprep.subr.bf16.mxu0 0
    %554 = vmatpush1.bf16.msra.mxu0 0
    %555 = vmatprep.subr.bf16.mxu0 0
    %556 = vmatpush1.bf16.msra.mxu0 0
    %557 = vmatprep.subr.bf16.mxu0 0
    %558 = vmatpush1.bf16.msra.mxu0 0
    %559 = vmatprep.subr.bf16.mxu0 0
    %560 = vmatpush1.bf16.msra.mxu0 0
    %561 = vmatprep.subr.bf16.mxu0 0
    %562 = vmatpush1.bf16.msra.mxu0 0
    %563 = vmatprep.subr.bf16.mxu0 0
    %564 = vmatpush1.bf16.msra.mxu0 0
    %565 = vmatprep.subr.bf16.mxu0 0
    %566 = vmatpush1.bf16.msra.mxu0 0
    %567 = vmatprep.subr.bf16.mxu0 0
    %568 = vmatpush1.bf16.msra.mxu0 0
    %569 = vmatprep.subr.bf16.mxu0 0
    %570 = vmatpush1.bf16.msra.mxu0 0
    %571 = vmatprep.subr.bf16.mxu0 0
    %572 = vmatpush1.bf16.msra.mxu0 0
    %573 = vmatprep.mubr.bf16.mxu0 0
    %574 = vmatmul.mubr.bf16.gmra.mrb[0].mxu0 %v536
    %v575 = vpop.f32.mrb[0].mxu0
    %v576 = vadd.f32 0.0, %v575
    %v577 = vpop.f32.mrb[0].mxu0
    %v578 = vpop.f32.mrb[0].mxu0
    %v579 = vpop.f32.mrb[0].mxu0
    %580 = vdwg.mxu0
    %581 = vrot.lane.b32.xlu0 %v139, 112
    %v582 = vpop.permute.xlu0 %581
    %583 = vrot.lane.b32.xlu0 %v139, 80
    %v584 = vpop.permute.xlu0 %583
    %v586 = vsel %vm144, %v582, 0
    %v589 = vsel %vm144, %v584, 0
    %591 = vmatprep.subr.bf16.mxu0 0
    %592 = vmatpush1.bf16.xpose.msra.mxu0 %v589
    %593 = vmatprep.subr.bf16.mxu0 0
    %594 = vmatpush1.bf16.xpose.msra.mxu0 0
    %595 = vmatprep.subr.bf16.mxu0 0
    %596 = vmatpush1.bf16.xpose.msra.mxu0 0
    %597 = vmatprep.subr.bf16.mxu0 0
    %598 = vmatpush1.bf16.xpose.msra.mxu0 0
    %599 = vmatprep.subr.bf16.mxu0 0
    %600 = vmatpush1.bf16.xpose.msra.mxu0 0
    %601 = vmatprep.subr.bf16.mxu0 0
    %602 = vmatpush1.bf16.xpose.msra.mxu0 0
    %603 = vmatprep.subr.bf16.mxu0 0
    %604 = vmatpush1.bf16.xpose.msra.mxu0 0
    %605 = vmatprep.subr.bf16.mxu0 0
    %606 = vmatpush1.bf16.xpose.msra.mxu0 0
    %607 = vmatprep.subr.bf16.mxu0 0
    %608 = vmatpush1.bf16.xpose.msra.mxu0 0
    %609 = vmatprep.subr.bf16.mxu0 0
    %610 = vmatpush1.bf16.xpose.msra.mxu0 0
    %611 = vmatprep.subr.bf16.mxu0 0
    %612 = vmatpush1.bf16.xpose.msra.mxu0 0
    %613 = vmatprep.subr.bf16.mxu0 0
    %614 = vmatpush1.bf16.xpose.msra.mxu0 0
    %615 = vmatprep.subr.bf16.mxu0 0
    %616 = vmatpush1.bf16.xpose.msra.mxu0 0
    %617 = vmatprep.subr.bf16.mxu0 0
    %618 = vmatpush1.bf16.xpose.msra.mxu0 0
    %619 = vmatprep.subr.bf16.mxu0 0
    %620 = vmatpush1.bf16.xpose.msra.mxu0 0
    %621 = vmatprep.subr.bf16.mxu0 0
    %622 = vmatpush1.bf16.xpose.msra.mxu0 0
    %623 = vmatprep.mubr.bf16.mxu0 0
    %624 = vmatmul.mubr.bf16.gmra.mrb[0].mxu0 %v586
    %v625 = vpop.f32.mrb[0].mxu0
    %v626 = vadd.f32 0.0, %v625
    %v627 = vpop.f32.mrb[0].mxu0
    %v628 = vpop.f32.mrb[0].mxu0
    %v629 = vpop.f32.mrb[0].mxu0
    %630 = vdwg.mxu0
    %631 = vrot.lane.b32.xlu0 %v140, 112
    %v632 = vpop.permute.xlu0 %631
    %633 = vrot.lane.b32.xlu0 %v140, 80
    %v634 = vpop.permute.xlu0 %633
    %v636 = vsel %vm144, %v632, 0
    %v639 = vsel %vm144, %v634, 0
    %641 = vmatprep.subr.bf16.mxu0 0
    %642 = vmatpush1.bf16.xpose.msra.mxu0 %v639
    %643 = vmatprep.subr.bf16.mxu0 0
    %644 = vmatpush1.bf16.xpose.msra.mxu0 0
    %645 = vmatprep.subr.bf16.mxu0 0
    %646 = vmatpush1.bf16.xpose.msra.mxu0 0
    %647 = vmatprep.subr.bf16.mxu0 0
    %648 = vmatpush1.bf16.xpose.msra.mxu0 0
    %649 = vmatprep.subr.bf16.mxu0 0
    %650 = vmatpush1.bf16.xpose.msra.mxu0 0
    %651 = vmatprep.subr.bf16.mxu0 0
    %652 = vmatpush1.bf16.xpose.msra.mxu0 0
    %653 = vmatprep.subr.bf16.mxu0 0
    %654 = vmatpush1.bf16.xpose.msra.mxu0 0
    %655 = vmatprep.subr.bf16.mxu0 0
    %656 = vmatpush1.bf16.xpose.msra.mxu0 0
    %657 = vmatprep.subr.bf16.mxu0 0
    %658 = vmatpush1.bf16.xpose.msra.mxu0 0
    %659 = vmatprep.subr.bf16.mxu0 0
    %660 = vmatpush1.bf16.xpose.msra.mxu0 0
    %661 = vmatprep.subr.bf16.mxu0 0
    %662 = vmatpush1.bf16.xpose.msra.mxu0 0
    %663 = vmatprep.subr.bf16.mxu0 0
    %664 = vmatpush1.bf16.xpose.msra.mxu0 0
    %665 = vmatprep.subr.bf16.mxu0 0
    %666 = vmatpush1.bf16.xpose.msra.mxu0 0
    %667 = vmatprep.subr.bf16.mxu0 0
    %668 = vmatpush1.bf16.xpose.msra.mxu0 0
    %669 = vmatprep.subr.bf16.mxu0 0
    %670 = vmatpush1.bf16.xpose.msra.mxu0 0
    %671 = vmatprep.subr.bf16.mxu0 0
    %672 = vmatpush1.bf16.xpose.msra.mxu0 0
    %673 = vmatprep.mubr.bf16.mxu0 0
    %674 = vmatmul.mubr.bf16.gmra.mrb[0].mxu0 %v636
    %v675 = vpop.f32.mrb[0].mxu0
    %v676 = vadd.f32 0.0, %v675
    %v677 = vpop.f32.mrb[0].mxu0
    %v678 = vpop.f32.mrb[0].mxu0
    %v679 = vpop.f32.mrb[0].mxu0
    %680 = vdwg.mxu0
    %v681 = vsel %vm144, %v626, -inf
    %682 = vmax.xlane.f32.xlu0 %v681
    %v683 = vpop.xlane.xlu0 %682
    %v684 = vsel %vm144, %v676, -inf
    %685 = vmax.xlane.f32.xlu0 %v684
    %v686 = vpop.xlane.xlu0 %685
    %v687 = vsub.f32 %v626, %v683
    %v688 = vsub.f32 %v676, %v686
    %v689 = vmul.f32 %v687, 1.442695
    %v690 = vpow.pop %v689
    %v691 = vmul.f32 %v688, 1.442695
    %v692 = vpow.pop %v691
    %v693 = vsel %vm144, %v690, 0.0
    %694 = vadd.xlane.f32.xlu0 %v693
    %v695 = vpop.xlane.xlu0 %694
    %v696 = vsel %vm144, %v692, 0.0
    %697 = vadd.xlane.f32.xlu0 %v696
    %v698 = vpop.xlane.xlu0 %697
    %v699 = vrcp.pop %v695
    %v700 = vrcp.pop %v698
    %v701 = vmul.f32 %v690, %v699
    %v702 = vmul.f32 %v692, %v700
    %v703 = vpack.c.bf16 %v701, %v701
    %v704 = vpack.c.bf16 %v702, %v702
    %705 = vrot.lane.b32.xlu0 %v139, 48
    %v706 = vpop.permute.xlu0 %705
    %v708 = vsel %vm144, %v703, 0
    %v711 = vsel %vm269, %v706, 0
    %713 = vmatprep.subr.bf16.mxu0 0
    %714 = vmatpush1.bf16.msra.mxu0 %v711
    %715 = vmatprep.subr.bf16.mxu0 0
    %716 = vmatpush1.bf16.msra.mxu0 0
    %717 = vmatprep.subr.bf16.mxu0 0
    %718 = vmatpush1.bf16.msra.mxu0 0
    %719 = vmatprep.subr.bf16.mxu0 0
    %720 = vmatpush1.bf16.msra.mxu0 0
    %721 = vmatprep.subr.bf16.mxu0 0
    %722 = vmatpush1.bf16.msra.mxu0 0
    %723 = vmatprep.subr.bf16.mxu0 0
    %724 = vmatpush1.bf16.msra.mxu0 0
    %725 = vmatprep.subr.bf16.mxu0 0
    %726 = vmatpush1.bf16.msra.mxu0 0
    %727 = vmatprep.subr.bf16.mxu0 0
    %728 = vmatpush1.bf16.msra.mxu0 0
    %729 = vmatprep.subr.bf16.mxu0 0
    %730 = vmatpush1.bf16.msra.mxu0 0
    %731 = vmatprep.subr.bf16.mxu0 0
    %732 = vmatpush1.bf16.msra.mxu0 0
    %733 = vmatprep.subr.bf16.mxu0 0
    %734 = vmatpush1.bf16.msra.mxu0 0
    %735 = vmatprep.subr.bf16.mxu0 0
    %736 = vmatpush1.bf16.msra.mxu0 0
    %737 = vmatprep.subr.bf16.mxu0 0
    %738 = vmatpush1.bf16.msra.mxu0 0
    %739 = vmatprep.subr.bf16.mxu0 0
    %740 = vmatpush1.bf16.msra.mxu0 0
    %741 = vmatprep.subr.bf16.mxu0 0
    %742 = vmatpush1.bf16.msra.mxu0 0
    %743 = vmatprep.subr.bf16.mxu0 0
    %744 = vmatpush1.bf16.msra.mxu0 0
    %745 = vmatprep.mubr.bf16.mxu0 0
    %746 = vmatmul.mubr.bf16.gmra.mrb[0].mxu0 %v708
    %v747 = vpop.f32.mrb[0].mxu0
    %v748 = vadd.f32 0.0, %v747
    %v749 = vpop.f32.mrb[0].mxu0
    %v750 = vpop.f32.mrb[0].mxu0
    %v751 = vpop.f32.mrb[0].mxu0
    %752 = vdwg.mxu0
    %753 = vrot.lane.b32.xlu0 %v140, 48
    %v754 = vpop.permute.xlu0 %753
    %v756 = vsel %vm144, %v704, 0
    %v759 = vsel %vm269, %v754, 0
    %761 = vmatprep.subr.bf16.mxu0 0
    %762 = vmatpush1.bf16.msra.mxu0 %v759
    %763 = vmatprep.subr.bf16.mxu0 0
    %764 = vmatpush1.bf16.msra.mxu0 0
    %765 = vmatprep.subr.bf16.mxu0 0
    %766 = vmatpush1.bf16.msra.mxu0 0
    %767 = vmatprep.subr.bf16.mxu0 0
    %768 = vmatpush1.bf16.msra.mxu0 0
    %769 = vmatprep.subr.bf16.mxu0 0
    %770 = vmatpush1.bf16.msra.mxu0 0
    %771 = vmatprep.subr.bf16.mxu0 0
    %772 = vmatpush1.bf16.msra.mxu0 0
    %773 = vmatprep.subr.bf16.mxu0 0
    %774 = vmatpush1.bf16.msra.mxu0 0
    %775 = vmatprep.subr.bf16.mxu0 0
    %776 = vmatpush1.bf16.msra.mxu0 0
    %777 = vmatprep.subr.bf16.mxu0 0
    %778 = vmatpush1.bf16.msra.mxu0 0
    %779 = vmatprep.subr.bf16.mxu0 0
    %780 = vmatpush1.bf16.msra.mxu0 0
    %781 = vmatprep.subr.bf16.mxu0 0
    %782 = vmatpush1.bf16.msra.mxu0 0
    %783 = vmatprep.subr.bf16.mxu0 0
    %784 = vmatpush1.bf16.msra.mxu0 0
    %785 = vmatprep.subr.bf16.mxu0 0
    %786 = vmatpush1.bf16.msra.mxu0 0
    %787 = vmatprep.subr.bf16.mxu0 0
    %788 = vmatpush1.bf16.msra.mxu0 0
    %789 = vmatprep.subr.bf16.mxu0 0
    %790 = vmatpush1.bf16.msra.mxu0 0
    %791 = vmatprep.subr.bf16.mxu0 0
    %792 = vmatpush1.bf16.msra.mxu0 0
    %793 = vmatprep.mubr.bf16.mxu0 0
    %794 = vmatmul.mubr.bf16.gmra.mrb[0].mxu0 %v756
    %v795 = vpop.f32.mrb[0].mxu0
    %v796 = vadd.f32 0.0, %v795
    %v797 = vpop.f32.mrb[0].mxu0
    %v798 = vpop.f32.mrb[0].mxu0
    %v799 = vpop.f32.mrb[0].mxu0
    %800 = vdwg.mxu0
    %801 = vrot.lane.b32.xlu0 %v139, 104
    %v802 = vpop.permute.xlu0 %801
    %803 = vrot.lane.b32.xlu0 %v139, 72
    %v804 = vpop.permute.xlu0 %803
    %v806 = vsel %vm144, %v802, 0
    %v809 = vsel %vm144, %v804, 0
    %811 = vmatprep.subr.bf16.mxu0 0
    %812 = vmatpush1.bf16.xpose.msra.mxu0 %v809
    %813 = vmatprep.subr.bf16.mxu0 0
    %814 = vmatpush1.bf16.xpose.msra.mxu0 0
    %815 = vmatprep.subr.bf16.mxu0 0
    %816 = vmatpush1.bf16.xpose.msra.mxu0 0
    %817 = vmatprep.subr.bf16.mxu0 0
    %818 = vmatpush1.bf16.xpose.msra.mxu0 0
    %819 = vmatprep.subr.bf16.mxu0 0
    %820 = vmatpush1.bf16.xpose.msra.mxu0 0
    %821 = vmatprep.subr.bf16.mxu0 0
    %822 = vmatpush1.bf16.xpose.msra.mxu0 0
    %823 = vmatprep.subr.bf16.mxu0 0
    %824 = vmatpush1.bf16.xpose.msra.mxu0 0
    %825 = vmatprep.subr.bf16.mxu0 0
    %826 = vmatpush1.bf16.xpose.msra.mxu0 0
    %827 = vmatprep.subr.bf16.mxu0 0
    %828 = vmatpush1.bf16.xpose.msra.mxu0 0
    %829 = vmatprep.subr.bf16.mxu0 0
    %830 = vmatpush1.bf16.xpose.msra.mxu0 0
    %831 = vmatprep.subr.bf16.mxu0 0
    %832 = vmatpush1.bf16.xpose.msra.mxu0 0
    %833 = vmatprep.subr.bf16.mxu0 0
    %834 = vmatpush1.bf16.xpose.msra.mxu0 0
    %835 = vmatprep.subr.bf16.mxu0 0
    %836 = vmatpush1.bf16.xpose.msra.mxu0 0
    %837 = vmatprep.subr.bf16.mxu0 0
    %838 = vmatpush1.bf16.xpose.msra.mxu0 0
    %839 = vmatprep.subr.bf16.mxu0 0
    %840 = vmatpush1.bf16.xpose.msra.mxu0 0
    %841 = vmatprep.subr.bf16.mxu0 0
    %842 = vmatpush1.bf16.xpose.msra.mxu0 0
    %843 = vmatprep.mubr.bf16.mxu0 0
    %844 = vmatmul.mubr.bf16.gmra.mrb[0].mxu0 %v806
    %v845 = vpop.f32.mrb[0].mxu0
    %v846 = vadd.f32 0.0, %v845
    %v847 = vpop.f32.mrb[0].mxu0
    %v848 = vpop.f32.mrb[0].mxu0
    %v849 = vpop.f32.mrb[0].mxu0
    %850 = vdwg.mxu0
    %851 = vrot.lane.b32.xlu0 %v140, 104
    %v852 = vpop.permute.xlu0 %851
    %853 = vrot.lane.b32.xlu0 %v140, 72
    %v854 = vpop.permute.xlu0 %853
    %v856 = vsel %vm144, %v852, 0
    %v859 = vsel %vm144, %v854, 0
    %861 = vmatprep.subr.bf16.mxu0 0
    %862 = vmatpush1.bf16.xpose.msra.mxu0 %v859
    %863 = vmatprep.subr.bf16.mxu0 0
    %864 = vmatpush1.bf16.xpose.msra.mxu0 0
    %865 = vmatprep.subr.bf16.mxu0 0
    %866 = vmatpush1.bf16.xpose.msra.mxu0 0
    %867 = vmatprep.subr.bf16.mxu0 0
    %868 = vmatpush1.bf16.xpose.msra.mxu0 0
    %869 = vmatprep.subr.bf16.mxu0 0
    %870 = vmatpush1.bf16.xpose.msra.mxu0 0
    %871 = vmatprep.subr.bf16.mxu0 0
    %872 = vmatpush1.bf16.xpose.msra.mxu0 0
    %873 = vmatprep.subr.bf16.mxu0 0
    %874 = vmatpush1.bf16.xpose.msra.mxu0 0
    %875 = vmatprep.subr.bf16.mxu0 0
    %876 = vmatpush1.bf16.xpose.msra.mxu0 0
    %877 = vmatprep.subr.bf16.mxu0 0
    %878 = vmatpush1.bf16.xpose.msra.mxu0 0
    %879 = vmatprep.subr.bf16.mxu0 0
    %880 = vmatpush1.bf16.xpose.msra.mxu0 0
    %881 = vmatprep.subr.bf16.mxu0 0
    %882 = vmatpush1.bf16.xpose.msra.mxu0 0
    %883 = vmatprep.subr.bf16.mxu0 0
    %884 = vmatpush1.bf16.xpose.msra.mxu0 0
    %885 = vmatprep.subr.bf16.mxu0 0
    %886 = vmatpush1.bf16.xpose.msra.mxu0 0
    %887 = vmatprep.subr.bf16.mxu0 0
    %888 = vmatpush1.bf16.xpose.msra.mxu0 0
    %889 = vmatprep.subr.bf16.mxu0 0
    %890 = vmatpush1.bf16.xpose.msra.mxu0 0
    %891 = vmatprep.subr.bf16.mxu0 0
    %892 = vmatpush1.bf16.xpose.msra.mxu0 0
    %893 = vmatprep.mubr.bf16.mxu0 0
    %894 = vmatmul.mubr.bf16.gmra.mrb[0].mxu0 %v856
    %v895 = vpop.f32.mrb[0].mxu0
    %v896 = vadd.f32 0.0, %v895
    %v897 = vpop.f32.mrb[0].mxu0
    %v898 = vpop.f32.mrb[0].mxu0
    %v899 = vpop.f32.mrb[0].mxu0
    %900 = vdwg.mxu0
    %v901 = vsel %vm144, %v846, -inf
    %902 = vmax.xlane.f32.xlu0 %v901
    %v903 = vpop.xlane.xlu0 %902
    %v904 = vsel %vm144, %v896, -inf
    %905 = vmax.xlane.f32.xlu0 %v904
    %v906 = vpop.xlane.xlu0 %905
    %v907 = vsub.f32 %v846, %v903
    %v908 = vsub.f32 %v896, %v906
    %v909 = vmul.f32 %v907, 1.442695
    %v910 = vpow.pop %v909
    %v911 = vmul.f32 %v908, 1.442695
    %v912 = vpow.pop %v911
    %v913 = vsel %vm144, %v910, 0.0
    %914 = vadd.xlane.f32.xlu0 %v913
    %v915 = vpop.xlane.xlu0 %914
    %v916 = vsel %vm144, %v912, 0.0
    %917 = vadd.xlane.f32.xlu0 %v916
    %v918 = vpop.xlane.xlu0 %917
    %v919 = vrcp.pop %v915
    %v920 = vrcp.pop %v918
    %v921 = vmul.f32 %v910, %v919
    %v922 = vmul.f32 %v912, %v920
    %v923 = vpack.c.bf16 %v921, %v921
    %v924 = vpack.c.bf16 %v922, %v922
    %925 = vrot.lane.b32.xlu0 %v139, 40
    %v926 = vpop.permute.xlu0 %925
    %v928 = vsel %vm144, %v923, 0
    %v931 = vsel %vm269, %v926, 0
    %933 = vmatprep.subr.bf16.mxu0 0
    %934 = vmatpush1.bf16.msra.mxu0 %v931
    %935 = vmatprep.subr.bf16.mxu0 0
    %936 = vmatpush1.bf16.msra.mxu0 0
    %937 = vmatprep.subr.bf16.mxu0 0
    %938 = vmatpush1.bf16.msra.mxu0 0
    %939 = vmatprep.subr.bf16.mxu0 0
    %940 = vmatpush1.bf16.msra.mxu0 0
    %941 = vmatprep.subr.bf16.mxu0 0
    %942 = vmatpush1.bf16.msra.mxu0 0
    %943 = vmatprep.subr.bf16.mxu0 0
    %944 = vmatpush1.bf16.msra.mxu0 0
    %945 = vmatprep.subr.bf16.mxu0 0
    %946 = vmatpush1.bf16.msra.mxu0 0
    %947 = vmatprep.subr.bf16.mxu0 0
    %948 = vmatpush1.bf16.msra.mxu0 0
    %949 = vmatprep.subr.bf16.mxu0 0
    %950 = vmatpush1.bf16.msra.mxu0 0
    %951 = vmatprep.subr.bf16.mxu0 0
    %952 = vmatpush1.bf16.msra.mxu0 0
    %953 = vmatprep.subr.bf16.mxu0 0
    %954 = vmatpush1.bf16.msra.mxu0 0
    %955 = vmatprep.subr.bf16.mxu0 0
    %956 = vmatpush1.bf16.msra.mxu0 0
    %957 = vmatprep.subr.bf16.mxu0 0
    %958 = vmatpush1.bf16.msra.mxu0 0
    %959 = vmatprep.subr.bf16.mxu0 0
    %960 = vmatpush1.bf16.msra.mxu0 0
    %961 = vmatprep.subr.bf16.mxu0 0
    %962 = vmatpush1.bf16.msra.mxu0 0
    %963 = vmatprep.subr.bf16.mxu0 0
    %964 = vmatpush1.bf16.msra.mxu0 0
    %965 = vmatprep.mubr.bf16.mxu0 0
    %966 = vmatmul.mubr.bf16.gmra.mrb[0].mxu0 %v928
    %v967 = vpop.f32.mrb[0].mxu0
    %v968 = vadd.f32 0.0, %v967
    %v969 = vpop.f32.mrb[0].mxu0
    %v970 = vpop.f32.mrb[0].mxu0
    %v971 = vpop.f32.mrb[0].mxu0
    %972 = vdwg.mxu0
    %973 = vrot.lane.b32.xlu0 %v140, 40
    %v974 = vpop.permute.xlu0 %973
    %v976 = vsel %vm144, %v924, 0
    %v979 = vsel %vm269, %v974, 0
    %981 = vmatprep.subr.bf16.mxu0 0
    %982 = vmatpush1.bf16.msra.mxu0 %v979
    %983 = vmatprep.subr.bf16.mxu0 0
    %984 = vmatpush1.bf16.msra.mxu0 0
    %985 = vmatprep.subr.bf16.mxu0 0
    %986 = vmatpush1.bf16.msra.mxu0 0
    %987 = vmatprep.subr.bf16.mxu0 0
    %988 = vmatpush1.bf16.msra.mxu0 0
    %989 = vmatprep.subr.bf16.mxu0 0
    %990 = vmatpush1.bf16.msra.mxu0 0
    %991 = vmatprep.subr.bf16.mxu0 0
    %992 = vmatpush1.bf16.msra.mxu0 0
    %993 = vmatprep.subr.bf16.mxu0 0
    %994 = vmatpush1.bf16.msra.mxu0 0
    %995 = vmatprep.subr.bf16.mxu0 0
    %996 = vmatpush1.bf16.msra.mxu0 0
    %997 = vmatprep.subr.bf16.mxu0 0
    %998 = vmatpush1.bf16.msra.mxu0 0
    %999 = vmatprep.subr.bf16.mxu0 0
    %1000 = vmatpush1.bf16.msra.mxu0 0
    %1001 = vmatprep.subr.bf16.mxu0 0
    %1002 = vmatpush1.bf16.msra.mxu0 0
    %1003 = vmatprep.subr.bf16.mxu0 0
    %1004 = vmatpush1.bf16.msra.mxu0 0
    %1005 = vmatprep.subr.bf16.mxu0 0
    %1006 = vmatpush1.bf16.msra.mxu0 0
    %1007 = vmatprep.subr.bf16.mxu0 0
    %1008 = vmatpush1.bf16.msra.mxu0 0
    %1009 = vmatprep.subr.bf16.mxu0 0
    %1010 = vmatpush1.bf16.msra.mxu0 0
    %1011 = vmatprep.subr.bf16.mxu0 0
    %1012 = vmatpush1.bf16.msra.mxu0 0
    %1013 = vmatprep.mubr.bf16.mxu0 0
    %1014 = vmatmul.mubr.bf16.gmra.mrb[0].mxu0 %v976
    %v1015 = vpop.f32.mrb[0].mxu0
    %v1016 = vadd.f32 0.0, %v1015
    %v1017 = vpop.f32.mrb[0].mxu0
    %v1018 = vpop.f32.mrb[0].mxu0
    %v1019 = vpop.f32.mrb[0].mxu0
    %1020 = vdwg.mxu0
    %1023 = vrot.lane.b32.xlu0 %v528, 8
    %v1024 = vpop.permute.xlu0 %1023
    %1025 = vrot.lane.b32.xlu0 %v576, 8
    %v1026 = vpop.permute.xlu0 %1025
    %1031 = vrot.lane.b32.xlu0 %v748, 16
    %v1032 = vpop.permute.xlu0 %1031
    %1033 = vrot.lane.b32.xlu0 %v796, 16
    %v1034 = vpop.permute.xlu0 %1033
    %1039 = vrot.lane.b32.xlu0 %v968, 24
    %v1040 = vpop.permute.xlu0 %1039
    %1041 = vrot.lane.b32.xlu0 %v1016, 24
    %v1042 = vpop.permute.xlu0 %1041
    %v1045 = vsel %vm144, %v308, %v1024
    %v1046 = vsel %vm144, %v356, %v1026
    %vm1047 = vcmask 130048
    %v1048 = vsel %vm1047, %v1045, %v1032
    %v1049 = vsel %vm1047, %v1046, %v1034
    %vm1050 = vcmask 195584
    %v1051 = vsel %vm1050, %v1048, %v1040
    %v1052 = vsel %vm1050, %v1049, %v1042
    %v1053 = vpack.c.bf16 %v1052, %v1051
    %v1055 = vlaneseq
    %v1056 = vshrl.u32 %v1055, 7
    %v1057 = vsub.s32 0, %v1056
    %v1058 = vrot.slane %v74, %v1057
    %v1064 = vunpack.c.l.b16 %v70
    %v1065 = vunpack.c.l.b16 %v71
    %v1066 = vunpack.c.l.b16 %v72
    %v1067 = vunpack.c.l.b16 %v73
    %v1068 = vpack.c.b16 %v1065, %v1064
    %v1069 = vpack.c.b16 %v1067, %v1066
    %v1073 = vsel %vm94, %v1053, 0
    %1075 = vmatprep.subr.bf16.mxu0 0
    %1076 = vmatpush1.bf16.msra.mxu0 %v1068
    %1077 = vmatprep.subr.bf16.mxu0 0
    %1078 = vmatpush1.bf16.msra.mxu0 %v1069
    %1079 = vmatprep.subr.bf16.mxu0 0
    %1080 = vmatpush1.bf16.msra.mxu0 0
    %1081 = vmatprep.subr.bf16.mxu0 0
    %1082 = vmatpush1.bf16.msra.mxu0 0
    %1083 = vmatprep.subr.bf16.mxu0 0
    %1084 = vmatpush1.bf16.msra.mxu0 0
    %1085 = vmatprep.subr.bf16.mxu0 0
    %1086 = vmatpush1.bf16.msra.mxu0 0
    %1087 = vmatprep.subr.bf16.mxu0 0
    %1088 = vmatpush1.bf16.msra.mxu0 0
    %1089 = vmatprep.subr.bf16.mxu0 0
    %1090 = vmatpush1.bf16.msra.mxu0 0
    %1091 = vmatprep.subr.bf16.mxu0 0
    %1092 = vmatpush1.bf16.msra.mxu0 0
    %1093 = vmatprep.subr.bf16.mxu0 0
    %1094 = vmatpush1.bf16.msra.mxu0 0
    %1095 = vmatprep.subr.bf16.mxu0 0
    %1096 = vmatpush1.bf16.msra.mxu0 0
    %1097 = vmatprep.subr.bf16.mxu0 0
    %1098 = vmatpush1.bf16.msra.mxu0 0
    %1099 = vmatprep.subr.bf16.mxu0 0
    %1100 = vmatpush1.bf16.msra.mxu0 0
    %1101 = vmatprep.subr.bf16.mxu0 0
    %1102 = vmatpush1.bf16.msra.mxu0 0
    %1103 = vmatprep.subr.bf16.mxu0 0
    %1104 = vmatpush1.bf16.msra.mxu0 0
    %1105 = vmatprep.subr.bf16.mxu0 0
    %1106 = vmatpush1.bf16.msra.mxu0 0
    %1107 = vmatprep.mubr.bf16.mxu0 0
    %1108 = vmatmul.mubr.bf16.gmra.mrb[0].mxu0 %v1073
    %v1109 = vpop.f32.mrb[0].mxu0
    %v1110 = vadd.f32 %v1058, %v1109
    %v1111 = vpop.f32.mrb[0].mxu0
    %v1112 = vpop.f32.mrb[0].mxu0
    %v1113 = vadd.f32 %v1058, %v1112
    %v1114 = vpop.f32.mrb[0].mxu0
    %1115 = vdwg.mxu0
    %s1116 = scalar_lea.vmem [#allocation5], 16
    %v1117 = vld [vmem:[%s1116] sm:$0xf]
    %v1118 = vld [vmem:[%s1116 + $0x4] sm:$0xf]
    %v1119 = vld [vmem:[%s1116 + $0x8] sm:$0xf]
    %v1120 = vld [vmem:[%s1116 + $0xc] sm:$0xf]
    %s1121 = scalar_lea.vmem %s2, 1
    %v1122 = vld [vmem:[%s1121] sm:$0x1]
    %s1123 = scalar_lea.vmem [#allocation7], 16
    %v1124 = vld [vmem:[%s1123] sm:$0xf]
    %v1125 = vld [vmem:[%s1123 + $0x4] sm:$0xf]
    %v1126 = vld [vmem:[%s1123 + $0x8] sm:$0xf]
    %v1127 = vld [vmem:[%s1123 + $0xc] sm:$0xf]
    %s1128 = scalar_lea.vmem %s4, 1
    %v1129 = vld [vmem:[%s1128] sm:$0x1]
    %v1130 = vpack.c.bf16 %v1113, %v1110
    %v1132 = vlaneseq
    %v1133 = vshrl.u32 %v1132, 7
    %v1134 = vsub.s32 0, %v1133
    %v1135 = vrot.slane %v1122, %v1134
    %v1141 = vunpack.c.l.b16 %v1117
    %v1142 = vunpack.c.l.b16 %v1118
    %v1143 = vunpack.c.l.b16 %v1119
    %v1144 = vunpack.c.l.b16 %v1120
    %v1145 = vpack.c.b16 %v1142, %v1141
    %v1146 = vpack.c.b16 %v1144, %v1143
    %v1150 = vsel %vm94, %v1130, 0
    %1152 = vmatprep.subr.bf16.mxu0 0
    %1153 = vmatpush1.bf16.msra.mxu0 %v1145
    %1154 = vmatprep.subr.bf16.mxu0 0
    %1155 = vmatpush1.bf16.msra.mxu0 %v1146
    %1156 = vmatprep.subr.bf16.mxu0 0
    %1157 = vmatpush1.bf16.msra.mxu0 0
    %1158 = vmatprep.subr.bf16.mxu0 0
    %1159 = vmatpush1.bf16.msra.mxu0 0
    %1160 = vmatprep.subr.bf16.mxu0 0
    %1161 = vmatpush1.bf16.msra.mxu0 0
    %1162 = vmatprep.subr.bf16.mxu0 0
    %1163 = vmatpush1.bf16.msra.mxu0 0
    %1164 = vmatprep.subr.bf16.mxu0 0
    %1165 = vmatpush1.bf16.msra.mxu0 0
    %1166 = vmatprep.subr.bf16.mxu0 0
    %1167 = vmatpush1.bf16.msra.mxu0 0
    %1168 = vmatprep.subr.bf16.mxu0 0
    %1169 = vmatpush1.bf16.msra.mxu0 0
    %1170 = vmatprep.subr.bf16.mxu0 0
    %1171 = vmatpush1.bf16.msra.mxu0 0
    %1172 = vmatprep.subr.bf16.mxu0 0
    %1173 = vmatpush1.bf16.msra.mxu0 0
    %1174 = vmatprep.subr.bf16.mxu0 0
    %1175 = vmatpush1.bf16.msra.mxu0 0
    %1176 = vmatprep.subr.bf16.mxu0 0
    %1177 = vmatpush1.bf16.msra.mxu0 0
    %1178 = vmatprep.subr.bf16.mxu0 0
    %1179 = vmatpush1.bf16.msra.mxu0 0
    %1180 = vmatprep.subr.bf16.mxu0 0
    %1181 = vmatpush1.bf16.msra.mxu0 0
    %1182 = vmatprep.subr.bf16.mxu0 0
    %1183 = vmatpush1.bf16.msra.mxu0 0
    %1184 = vmatprep.mubr.bf16.mxu0 0
    %1185 = vmatmul.mubr.bf16.gmra.mrb[0].mxu0 %v1150
    %v1186 = vpop.f32.mrb[0].mxu0
    %v1187 = vadd.f32 %v1135, %v1186
    %v1188 = vpop.f32.mrb[0].mxu0
    %v1189 = vpop.f32.mrb[0].mxu0
    %v1190 = vadd.f32 %v1135, %v1189
    %v1191 = vpop.f32.mrb[0].mxu0
    %1192 = vdwg.mxu0
    %v1193 = vpack.c.bf16 %v1187, %v1187
    %v1194 = vpack.c.bf16 %v1190, %v1190
    %1196 = vrot.lane.b32.xlu0 %v1193, 96
    %v1197 = vpop.permute.xlu0 %1196
    %v1199 = vsel %vm144, %v1193, 0
    %v1202 = vsel %vm144, %v1197, 0
    %1204 = vmatprep.subr.bf16.mxu0 0
    %1205 = vmatpush1.bf16.xpose.msra.mxu0 %v1202
    %1206 = vmatprep.subr.bf16.mxu0 0
    %1207 = vmatpush1.bf16.xpose.msra.mxu0 0
    %1208 = vmatprep.subr.bf16.mxu0 0
    %1209 = vmatpush1.bf16.xpose.msra.mxu0 0
    %1210 = vmatprep.subr.bf16.mxu0 0
    %1211 = vmatpush1.bf16.xpose.msra.mxu0 0
    %1212 = vmatprep.subr.bf16.mxu0 0
    %1213 = vmatpush1.bf16.xpose.msra.mxu0 0
    %1214 = vmatprep.subr.bf16.mxu0 0
    %1215 = vmatpush1.bf16.xpose.msra.mxu0 0
    %1216 = vmatprep.subr.bf16.mxu0 0
    %1217 = vmatpush1.bf16.xpose.msra.mxu0 0
    %1218 = vmatprep.subr.bf16.mxu0 0
    %1219 = vmatpush1.bf16.xpose.msra.mxu0 0
    %1220 = vmatprep.subr.bf16.mxu0 0
    %1221 = vmatpush1.bf16.xpose.msra.mxu0 0
    %1222 = vmatprep.subr.bf16.mxu0 0
    %1223 = vmatpush1.bf16.xpose.msra.mxu0 0
    %1224 = vmatprep.subr.bf16.mxu0 0
    %1225 = vmatpush1.bf16.xpose.msra.mxu0 0
    %1226 = vmatprep.subr.bf16.mxu0 0
    %1227 = vmatpush1.bf16.xpose.msra.mxu0 0
    %1228 = vmatprep.subr.bf16.mxu0 0
    %1229 = vmatpush1.bf16.xpose.msra.mxu0 0
    %1230 = vmatprep.subr.bf16.mxu0 0
    %1231 = vmatpush1.bf16.xpose.msra.mxu0 0
    %1232 = vmatprep.subr.bf16.mxu0 0
    %1233 = vmatpush1.bf16.xpose.msra.mxu0 0
    %1234 = vmatprep.subr.bf16.mxu0 0
    %1235 = vmatpush1.bf16.xpose.msra.mxu0 0
    %1236 = vmatprep.mubr.bf16.mxu0 0
    %1237 = vmatmul.mubr.bf16.gmra.mrb[0].mxu0 %v1199
    %v1238 = vpop.f32.mrb[0].mxu0
    %v1239 = vadd.f32 0.0, %v1238
    %v1240 = vpop.f32.mrb[0].mxu0
    %v1241 = vpop.f32.mrb[0].mxu0
    %v1242 = vpop.f32.mrb[0].mxu0
    %1243 = vdwg.mxu0
    %1245 = vrot.lane.b32.xlu0 %v1194, 96
    %v1246 = vpop.permute.xlu0 %1245
    %v1248 = vsel %vm144, %v1194, 0
    %v1251 = vsel %vm144, %v1246, 0
    %1253 = vmatprep.subr.bf16.mxu0 0
    %1254 = vmatpush1.bf16.xpose.msra.mxu0 %v1251
    %1255 = vmatprep.subr.bf16.mxu0 0
    %1256 = vmatpush1.bf16.xpose.msra.mxu0 0
    %1257 = vmatprep.subr.bf16.mxu0 0
    %1258 = vmatpush1.bf16.xpose.msra.mxu0 0
    %1259 = vmatprep.subr.bf16.mxu0 0
    %1260 = vmatpush1.bf16.xpose.msra.mxu0 0
    %1261 = vmatprep.subr.bf16.mxu0 0
    %1262 = vmatpush1.bf16.xpose.msra.mxu0 0
    %1263 = vmatprep.subr.bf16.mxu0 0
    %1264 = vmatpush1.bf16.xpose.msra.mxu0 0
    %1265 = vmatprep.subr.bf16.mxu0 0
    %1266 = vmatpush1.bf16.xpose.msra.mxu0 0
    %1267 = vmatprep.subr.bf16.mxu0 0
    %1268 = vmatpush1.bf16.xpose.msra.mxu0 0
    %1269 = vmatprep.subr.bf16.mxu0 0
    %1270 = vmatpush1.bf16.xpose.msra.mxu0 0
    %1271 = vmatprep.subr.bf16.mxu0 0
    %1272 = vmatpush1.bf16.xpose.msra.mxu0 0
    %1273 = vmatprep.subr.bf16.mxu0 0
    %1274 = vmatpush1.bf16.xpose.msra.mxu0 0
    %1275 = vmatprep.subr.bf16.mxu0 0
    %1276 = vmatpush1.bf16.xpose.msra.mxu0 0
    %1277 = vmatprep.subr.bf16.mxu0 0
    %1278 = vmatpush1.bf16.xpose.msra.mxu0 0
    %1279 = vmatprep.subr.bf16.mxu0 0
    %1280 = vmatpush1.bf16.xpose.msra.mxu0 0
    %1281 = vmatprep.subr.bf16.mxu0 0
    %1282 = vmatpush1.bf16.xpose.msra.mxu0 0
    %1283 = vmatprep.subr.bf16.mxu0 0
    %1284 = vmatpush1.bf16.xpose.msra.mxu0 0
    %1285 = vmatprep.mubr.bf16.mxu0 0
    %1286 = vmatmul.mubr.bf16.gmra.mrb[0].mxu0 %v1248
    %v1287 = vpop.f32.mrb[0].mxu0
    %v1288 = vadd.f32 0.0, %v1287
    %v1289 = vpop.f32.mrb[0].mxu0
    %v1290 = vpop.f32.mrb[0].mxu0
    %v1291 = vpop.f32.mrb[0].mxu0
    %1292 = vdwg.mxu0
    %v1293 = vsel %vm144, %v1239, -inf
    %1294 = vmax.xlane.f32.xlu0 %v1293
    %v1295 = vpop.xlane.xlu0 %1294
    %v1296 = vsel %vm144, %v1288, -inf
    %1297 = vmax.xlane.f32.xlu0 %v1296
    %v1298 = vpop.xlane.xlu0 %1297
    %v1299 = vsub.f32 %v1239, %v1295
    %v1300 = vsub.f32 %v1288, %v1298
    %v1301 = vmul.f32 %v1299, 1.442695
    %v1302 = vpow.pop %v1301
    %v1303 = vmul.f32 %v1300, 1.442695
    %v1304 = vpow.pop %v1303
    %v1305 = vsel %vm144, %v1302, 0.0
    %1306 = vadd.xlane.f32.xlu0 %v1305
    %v1307 = vpop.xlane.xlu0 %1306
    %v1308 = vsel %vm144, %v1304, 0.0
    %1309 = vadd.xlane.f32.xlu0 %v1308
    %v1310 = vpop.xlane.xlu0 %1309
    %v1311 = vrcp.pop %v1307
    %v1312 = vrcp.pop %v1310
    %v1313 = vmul.f32 %v1302, %v1311
    %v1314 = vmul.f32 %v1304, %v1312
    %v1315 = vpack.c.bf16 %v1313, %v1313
    %v1316 = vpack.c.bf16 %v1314, %v1314
    %1317 = vrot.lane.b32.xlu0 %v1193, 64
    %v1318 = vpop.permute.xlu0 %1317
    %v1320 = vsel %vm144, %v1315, 0
    %v1323 = vsel %vm269, %v1318, 0
    %1325 = vmatprep.subr.bf16.mxu0 0
    %1326 = vmatpush1.bf16.msra.mxu0 %v1323
    %1327 = vmatprep.subr.bf16.mxu0 0
    %1328 = vmatpush1.bf16.msra.mxu0 0
    %1329 = vmatprep.subr.bf16.mxu0 0
    %1330 = vmatpush1.bf16.msra.mxu0 0
    %1331 = vmatprep.subr.bf16.mxu0 0
    %1332 = vmatpush1.bf16.msra.mxu0 0
    %1333 = vmatprep.subr.bf16.mxu0 0
    %1334 = vmatpush1.bf16.msra.mxu0 0
    %1335 = vmatprep.subr.bf16.mxu0 0
    %1336 = vmatpush1.bf16.msra.mxu0 0
    %1337 = vmatprep.subr.bf16.mxu0 0
    %1338 = vmatpush1.bf16.msra.mxu0 0
    %1339 = vmatprep.subr.bf16.mxu0 0
    %1340 = vmatpush1.bf16.msra.mxu0 0
    %1341 = vmatprep.subr.bf16.mxu0 0
    %1342 = vmatpush1.bf16.msra.mxu0 0
    %1343 = vmatprep.subr.bf16.mxu0 0
    %1344 = vmatpush1.bf16.msra.mxu0 0
    %1345 = vmatprep.subr.bf16.mxu0 0
    %1346 = vmatpush1.bf16.msra.mxu0 0
    %1347 = vmatprep.subr.bf16.mxu0 0
    %1348 = vmatpush1.bf16.msra.mxu0 0
    %1349 = vmatprep.subr.bf16.mxu0 0
    %1350 = vmatpush1.bf16.msra.mxu0 0
    %1351 = vmatprep.subr.bf16.mxu0 0
    %1352 = vmatpush1.bf16.msra.mxu0 0
    %1353 = vmatprep.subr.bf16.mxu0 0
    %1354 = vmatpush1.bf16.msra.mxu0 0
    %1355 = vmatprep.subr.bf16.mxu0 0
    %1356 = vmatpush1.bf16.msra.mxu0 0
    %1357 = vmatprep.mubr.bf16.mxu0 0
    %1358 = vmatmul.mubr.bf16.gmra.mrb[0].mxu0 %v1320
    %v1359 = vpop.f32.mrb[0].mxu0
    %v1360 = vadd.f32 0.0, %v1359
    %v1361 = vpop.f32.mrb[0].mxu0
    %v1362 = vpop.f32.mrb[0].mxu0
    %v1363 = vpop.f32.mrb[0].mxu0
    %1364 = vdwg.mxu0
    %1365 = vrot.lane.b32.xlu0 %v1194, 64
    %v1366 = vpop.permute.xlu0 %1365
    %v1368 = vsel %vm144, %v1316, 0
    %v1371 = vsel %vm269, %v1366, 0
    %1373 = vmatprep.subr.bf16.mxu0 0
    %1374 = vmatpush1.bf16.msra.mxu0 %v1371
    %1375 = vmatprep.subr.bf16.mxu0 0
    %1376 = vmatpush1.bf16.msra.mxu0 0
    %1377 = vmatprep.subr.bf16.mxu0 0
    %1378 = vmatpush1.bf16.msra.mxu0 0
    %1379 = vmatprep.subr.bf16.mxu0 0
    %1380 = vmatpush1.bf16.msra.mxu0 0
    %1381 = vmatprep.subr.bf16.mxu0 0
    %1382 = vmatpush1.bf16.msra.mxu0 0
    %1383 = vmatprep.subr.bf16.mxu0 0
    %1384 = vmatpush1.bf16.msra.mxu0 0
    %1385 = vmatprep.subr.bf16.mxu0 0
    %1386 = vmatpush1.bf16.msra.mxu0 0
    %1387 = vmatprep.subr.bf16.mxu0 0
    %1388 = vmatpush1.bf16.msra.mxu0 0
    %1389 = vmatprep.subr.bf16.mxu0 0
    %1390 = vmatpush1.bf16.msra.mxu0 0
    %1391 = vmatprep.subr.bf16.mxu0 0
    %1392 = vmatpush1.bf16.msra.mxu0 0
    %1393 = vmatprep.subr.bf16.mxu0 0
    %1394 = vmatpush1.bf16.msra.mxu0 0
    %1395 = vmatprep.subr.bf16.mxu0 0
    %1396 = vmatpush1.bf16.msra.mxu0 0
    %1397 = vmatprep.subr.bf16.mxu0 0
    %1398 = vmatpush1.bf16.msra.mxu0 0
    %1399 = vmatprep.subr.bf16.mxu0 0
    %1400 = vmatpush1.bf16.msra.mxu0 0
    %1401 = vmatprep.subr.bf16.mxu0 0
    %1402 = vmatpush1.bf16.msra.mxu0 0
    %1403 = vmatprep.subr.bf16.mxu0 0
    %1404 = vmatpush1.bf16.msra.mxu0 0
    %1405 = vmatprep.mubr.bf16.mxu0 0
    %1406 = vmatmul.mubr.bf16.gmra.mrb[0].mxu0 %v1368
    %v1407 = vpop.f32.mrb[0].mxu0
    %v1408 = vadd.f32 0.0, %v1407
    %v1409 = vpop.f32.mrb[0].mxu0
    %v1410 = vpop.f32.mrb[0].mxu0
    %v1411 = vpop.f32.mrb[0].mxu0
    %1412 = vdwg.mxu0
    %1413 = vrot.lane.b32.xlu0 %v1193, 120
    %v1414 = vpop.permute.xlu0 %1413
    %1415 = vrot.lane.b32.xlu0 %v1193, 88
    %v1416 = vpop.permute.xlu0 %1415
    %v1418 = vsel %vm144, %v1414, 0
    %v1421 = vsel %vm144, %v1416, 0
    %1423 = vmatprep.subr.bf16.mxu0 0
    %1424 = vmatpush1.bf16.xpose.msra.mxu0 %v1421
    %1425 = vmatprep.subr.bf16.mxu0 0
    %1426 = vmatpush1.bf16.xpose.msra.mxu0 0
    %1427 = vmatprep.subr.bf16.mxu0 0
    %1428 = vmatpush1.bf16.xpose.msra.mxu0 0
    %1429 = vmatprep.subr.bf16.mxu0 0
    %1430 = vmatpush1.bf16.xpose.msra.mxu0 0
    %1431 = vmatprep.subr.bf16.mxu0 0
    %1432 = vmatpush1.bf16.xpose.msra.mxu0 0
    %1433 = vmatprep.subr.bf16.mxu0 0
    %1434 = vmatpush1.bf16.xpose.msra.mxu0 0
    %1435 = vmatprep.subr.bf16.mxu0 0
    %1436 = vmatpush1.bf16.xpose.msra.mxu0 0
    %1437 = vmatprep.subr.bf16.mxu0 0
    %1438 = vmatpush1.bf16.xpose.msra.mxu0 0
    %1439 = vmatprep.subr.bf16.mxu0 0
    %1440 = vmatpush1.bf16.xpose.msra.mxu0 0
    %1441 = vmatprep.subr.bf16.mxu0 0
    %1442 = vmatpush1.bf16.xpose.msra.mxu0 0
    %1443 = vmatprep.subr.bf16.mxu0 0
    %1444 = vmatpush1.bf16.xpose.msra.mxu0 0
    %1445 = vmatprep.subr.bf16.mxu0 0
    %1446 = vmatpush1.bf16.xpose.msra.mxu0 0
    %1447 = vmatprep.subr.bf16.mxu0 0
    %1448 = vmatpush1.bf16.xpose.msra.mxu0 0
    %1449 = vmatprep.subr.bf16.mxu0 0
    %1450 = vmatpush1.bf16.xpose.msra.mxu0 0
    %1451 = vmatprep.subr.bf16.mxu0 0
    %1452 = vmatpush1.bf16.xpose.msra.mxu0 0
    %1453 = vmatprep.subr.bf16.mxu0 0
    %1454 = vmatpush1.bf16.xpose.msra.mxu0 0
    %1455 = vmatprep.mubr.bf16.mxu0 0
    %1456 = vmatmul.mubr.bf16.gmra.mrb[0].mxu0 %v1418
    %v1457 = vpop.f32.mrb[0].mxu0
    %v1458 = vadd.f32 0.0, %v1457
    %v1459 = vpop.f32.mrb[0].mxu0
    %v1460 = vpop.f32.mrb[0].mxu0
    %v1461 = vpop.f32.mrb[0].mxu0
    %1462 = vdwg.mxu0
    %1463 = vrot.lane.b32.xlu0 %v1194, 120
    %v1464 = vpop.permute.xlu0 %1463
    %1465 = vrot.lane.b32.xlu0 %v1194, 88
    %v1466 = vpop.permute.xlu0 %1465
    %v1468 = vsel %vm144, %v1464, 0
    %v1471 = vsel %vm144, %v1466, 0
    %1473 = vmatprep.subr.bf16.mxu0 0
    %1474 = vmatpush1.bf16.xpose.msra.mxu0 %v1471
    %1475 = vmatprep.subr.bf16.mxu0 0
    %1476 = vmatpush1.bf16.xpose.msra.mxu0 0
    %1477 = vmatprep.subr.bf16.mxu0 0
    %1478 = vmatpush1.bf16.xpose.msra.mxu0 0
    %1479 = vmatprep.subr.bf16.mxu0 0
    %1480 = vmatpush1.bf16.xpose.msra.mxu0 0
    %1481 = vmatprep.subr.bf16.mxu0 0
    %1482 = vmatpush1.bf16.xpose.msra.mxu0 0
    %1483 = vmatprep.subr.bf16.mxu0 0
    %1484 = vmatpush1.bf16.xpose.msra.mxu0 0
    %1485 = vmatprep.subr.bf16.mxu0 0
    %1486 = vmatpush1.bf16.xpose.msra.mxu0 0
    %1487 = vmatprep.subr.bf16.mxu0 0
    %1488 = vmatpush1.bf16.xpose.msra.mxu0 0
    %1489 = vmatprep.subr.bf16.mxu0 0
    %1490 = vmatpush1.bf16.xpose.msra.mxu0 0
    %1491 = vmatprep.subr.bf16.mxu0 0
    %1492 = vmatpush1.bf16.xpose.msra.mxu0 0
    %1493 = vmatprep.subr.bf16.mxu0 0
    %1494 = vmatpush1.bf16.xpose.msra.mxu0 0
    %1495 = vmatprep.subr.bf16.mxu0 0
    %1496 = vmatpush1.bf16.xpose.msra.mxu0 0
    %1497 = vmatprep.subr.bf16.mxu0 0
    %1498 = vmatpush1.bf16.xpose.msra.mxu0 0
    %1499 = vmatprep.subr.bf16.mxu0 0
    %1500 = vmatpush1.bf16.xpose.msra.mxu0 0
    %1501 = vmatprep.subr.bf16.mxu0 0
    %1502 = vmatpush1.bf16.xpose.msra.mxu0 0
    %1503 = vmatprep.subr.bf16.mxu0 0
    %1504 = vmatpush1.bf16.xpose.msra.mxu0 0
    %1505 = vmatprep.mubr.bf16.mxu0 0
    %1506 = vmatmul.mubr.bf16.gmra.mrb[0].mxu0 %v1468
    %v1507 = vpop.f32.mrb[0].mxu0
    %v1508 = vadd.f32 0.0, %v1507
    %v1509 = vpop.f32.mrb[0].mxu0
    %v1510 = vpop.f32.mrb[0].mxu0
    %v1511 = vpop.f32.mrb[0].mxu0
    %1512 = vdwg.mxu0
    %v1513 = vsel %vm144, %v1458, -inf
    %1514 = vmax.xlane.f32.xlu0 %v1513
    %v1515 = vpop.xlane.xlu0 %1514
    %v1516 = vsel %vm144, %v1508, -inf
    %1517 = vmax.xlane.f32.xlu0 %v1516
    %v1518 = vpop.xlane.xlu0 %1517
    %v1519 = vsub.f32 %v1458, %v1515
    %v1520 = vsub.f32 %v1508, %v1518
    %v1521 = vmul.f32 %v1519, 1.442695
    %v1522 = vpow.pop %v1521
    %v1523 = vmul.f32 %v1520, 1.442695
    %v1524 = vpow.pop %v1523
    %v1525 = vsel %vm144, %v1522, 0.0
    %1526 = vadd.xlane.f32.xlu0 %v1525
    %v1527 = vpop.xlane.xlu0 %1526
    %v1528 = vsel %vm144, %v1524, 0.0
    %1529 = vadd.xlane.f32.xlu0 %v1528
    %v1530 = vpop.xlane.xlu0 %1529
    %v1531 = vrcp.pop %v1527
    %v1532 = vrcp.pop %v1530
    %v1533 = vmul.f32 %v1522, %v1531
    %v1534 = vmul.f32 %v1524, %v1532
    %v1535 = vpack.c.bf16 %v1533, %v1533
    %v1536 = vpack.c.bf16 %v1534, %v1534
    %1537 = vrot.lane.b32.xlu0 %v1193, 56
    %v1538 = vpop.permute.xlu0 %1537
    %v1540 = vsel %vm144, %v1535, 0
    %v1543 = vsel %vm269, %v1538, 0
    %1545 = vmatprep.subr.bf16.mxu0 0
    %1546 = vmatpush1.bf16.msra.mxu0 %v1543
    %1547 = vmatprep.subr.bf16.mxu0 0
    %1548 = vmatpush1.bf16.msra.mxu0 0
    %1549 = vmatprep.subr.bf16.mxu0 0
    %1550 = vmatpush1.bf16.msra.mxu0 0
    %1551 = vmatprep.subr.bf16.mxu0 0
    %1552 = vmatpush1.bf16.msra.mxu0 0
    %1553 = vmatprep.subr.bf16.mxu0 0
    %1554 = vmatpush1.bf16.msra.mxu0 0
    %1555 = vmatprep.subr.bf16.mxu0 0
    %1556 = vmatpush1.bf16.msra.mxu0 0
    %1557 = vmatprep.subr.bf16.mxu0 0
    %1558 = vmatpush1.bf16.msra.mxu0 0
    %1559 = vmatprep.subr.bf16.mxu0 0
    %1560 = vmatpush1.bf16.msra.mxu0 0
    %1561 = vmatprep.subr.bf16.mxu0 0
    %1562 = vmatpush1.bf16.msra.mxu0 0
    %1563 = vmatprep.subr.bf16.mxu0 0
    %1564 = vmatpush1.bf16.msra.mxu0 0
    %1565 = vmatprep.subr.bf16.mxu0 0
    %1566 = vmatpush1.bf16.msra.mxu0 0
    %1567 = vmatprep.subr.bf16.mxu0 0
    %1568 = vmatpush1.bf16.msra.mxu0 0
    %1569 = vmatprep.subr.bf16.mxu0 0
    %1570 = vmatpush1.bf16.msra.mxu0 0
    %1571 = vmatprep.subr.bf16.mxu0 0
    %1572 = vmatpush1.bf16.msra.mxu0 0
    %1573 = vmatprep.subr.bf16.mxu0 0
    %1574 = vmatpush1.bf16.msra.mxu0 0
    %1575 = vmatprep.subr.bf16.mxu0 0
    %1576 = vmatpush1.bf16.msra.mxu0 0
    %1577 = vmatprep.mubr.bf16.mxu0 0
    %1578 = vmatmul.mubr.bf16.gmra.mrb[0].mxu0 %v1540
    %v1579 = vpop.f32.mrb[0].mxu0
    %v1580 = vadd.f32 0.0, %v1579
    %v1581 = vpop.f32.mrb[0].mxu0
    %v1582 = vpop.f32.mrb[0].mxu0
    %v1583 = vpop.f32.mrb[0].mxu0
    %1584 = vdwg.mxu0
    %1585 = vrot.lane.b32.xlu0 %v1194, 56
    %v1586 = vpop.permute.xlu0 %1585
    %v1588 = vsel %vm144, %v1536, 0
    %v1591 = vsel %vm269, %v1586, 0
    %1593 = vmatprep.subr.bf16.mxu0 0
    %1594 = vmatpush1.bf16.msra.mxu0 %v1591
    %1595 = vmatprep.subr.bf16.mxu0 0
    %1596 = vmatpush1.bf16.msra.mxu0 0
    %1597 = vmatprep.subr.bf16.mxu0 0
    %1598 = vmatpush1.bf16.msra.mxu0 0
    %1599 = vmatprep.subr.bf16.mxu0 0
    %1600 = vmatpush1.bf16.msra.mxu0 0
    %1601 = vmatprep.subr.bf16.mxu0 0
    %1602 = vmatpush1.bf16.msra.mxu0 0
    %1603 = vmatprep.subr.bf16.mxu0 0
    %1604 = vmatpush1.bf16.msra.mxu0 0
    %1605 = vmatprep.subr.bf16.mxu0 0
    %1606 = vmatpush1.bf16.msra.mxu0 0
    %1607 = vmatprep.subr.bf16.mxu0 0
    %1608 = vmatpush1.bf16.msra.mxu0 0
    %1609 = vmatprep.subr.bf16.mxu0 0
    %1610 = vmatpush1.bf16.msra.mxu0 0
    %1611 = vmatprep.subr.bf16.mxu0 0
    %1612 = vmatpush1.bf16.msra.mxu0 0
    %1613 = vmatprep.subr.bf16.mxu0 0
    %1614 = vmatpush1.bf16.msra.mxu0 0
    %1615 = vmatprep.subr.bf16.mxu0 0
    %1616 = vmatpush1.bf16.msra.mxu0 0
    %1617 = vmatprep.subr.bf16.mxu0 0
    %1618 = vmatpush1.bf16.msra.mxu0 0
    %1619 = vmatprep.subr.bf16.mxu0 0
    %1620 = vmatpush1.bf16.msra.mxu0 0
    %1621 = vmatprep.subr.bf16.mxu0 0
    %1622 = vmatpush1.bf16.msra.mxu0 0
    %1623 = vmatprep.subr.bf16.mxu0 0
    %1624 = vmatpush1.bf16.msra.mxu0 0
    %1625 = vmatprep.mubr.bf16.mxu0 0
    %1626 = vmatmul.mubr.bf16.gmra.mrb[0].mxu0 %v1588
    %v1627 = vpop.f32.mrb[0].mxu0
    %v1628 = vadd.f32 0.0, %v1627
    %v1629 = vpop.f32.mrb[0].mxu0
    %v1630 = vpop.f32.mrb[0].mxu0
    %v1631 = vpop.f32.mrb[0].mxu0
    %1632 = vdwg.mxu0
    %1633 = vrot.lane.b32.xlu0 %v1193, 112
    %v1634 = vpop.permute.xlu0 %1633
    %1635 = vrot.lane.b32.xlu0 %v1193, 80
    %v1636 = vpop.permute.xlu0 %1635
    %v1638 = vsel %vm144, %v1634, 0
    %v1641 = vsel %vm144, %v1636, 0
    %1643 = vmatprep.subr.bf16.mxu0 0
    %1644 = vmatpush1.bf16.xpose.msra.mxu0 %v1641
    %1645 = vmatprep.subr.bf16.mxu0 0
    %1646 = vmatpush1.bf16.xpose.msra.mxu0 0
    %1647 = vmatprep.subr.bf16.mxu0 0
    %1648 = vmatpush1.bf16.xpose.msra.mxu0 0
    %1649 = vmatprep.subr.bf16.mxu0 0
    %1650 = vmatpush1.bf16.xpose.msra.mxu0 0
    %1651 = vmatprep.subr.bf16.mxu0 0
    %1652 = vmatpush1.bf16.xpose.msra.mxu0 0
    %1653 = vmatprep.subr.bf16.mxu0 0
    %1654 = vmatpush1.bf16.xpose.msra.mxu0 0
    %1655 = vmatprep.subr.bf16.mxu0 0
    %1656 = vmatpush1.bf16.xpose.msra.mxu0 0
    %1657 = vmatprep.subr.bf16.mxu0 0
    %1658 = vmatpush1.bf16.xpose.msra.mxu0 0
    %1659 = vmatprep.subr.bf16.mxu0 0
    %1660 = vmatpush1.bf16.xpose.msra.mxu0 0
    %1661 = vmatprep.subr.bf16.mxu0 0
    %1662 = vmatpush1.bf16.xpose.msra.mxu0 0
    %1663 = vmatprep.subr.bf16.mxu0 0
    %1664 = vmatpush1.bf16.xpose.msra.mxu0 0
    %1665 = vmatprep.subr.bf16.mxu0 0
    %1666 = vmatpush1.bf16.xpose.msra.mxu0 0
    %1667 = vmatprep.subr.bf16.mxu0 0
    %1668 = vmatpush1.bf16.xpose.msra.mxu0 0
    %1669 = vmatprep.subr.bf16.mxu0 0
    %1670 = vmatpush1.bf16.xpose.msra.mxu0 0
    %1671 = vmatprep.subr.bf16.mxu0 0
    %1672 = vmatpush1.bf16.xpose.msra.mxu0 0
    %1673 = vmatprep.subr.bf16.mxu0 0
    %1674 = vmatpush1.bf16.xpose.msra.mxu0 0
    %1675 = vmatprep.mubr.bf16.mxu0 0
    %1676 = vmatmul.mubr.bf16.gmra.mrb[0].mxu0 %v1638
    %v1677 = vpop.f32.mrb[0].mxu0
    %v1678 = vadd.f32 0.0, %v1677
    %v1679 = vpop.f32.mrb[0].mxu0
    %v1680 = vpop.f32.mrb[0].mxu0
    %v1681 = vpop.f32.mrb[0].mxu0
    %1682 = vdwg.mxu0
    %1683 = vrot.lane.b32.xlu0 %v1194, 112
    %v1684 = vpop.permute.xlu0 %1683
    %1685 = vrot.lane.b32.xlu0 %v1194, 80
    %v1686 = vpop.permute.xlu0 %1685
    %v1688 = vsel %vm144, %v1684, 0
    %v1691 = vsel %vm144, %v1686, 0
    %1693 = vmatprep.subr.bf16.mxu0 0
    %1694 = vmatpush1.bf16.xpose.msra.mxu0 %v1691
    %1695 = vmatprep.subr.bf16.mxu0 0
    %1696 = vmatpush1.bf16.xpose.msra.mxu0 0
    %1697 = vmatprep.subr.bf16.mxu0 0
    %1698 = vmatpush1.bf16.xpose.msra.mxu0 0
    %1699 = vmatprep.subr.bf16.mxu0 0
    %1700 = vmatpush1.bf16.xpose.msra.mxu0 0
    %1701 = vmatprep.subr.bf16.mxu0 0
    %1702 = vmatpush1.bf16.xpose.msra.mxu0 0
    %1703 = vmatprep.subr.bf16.mxu0 0
    %1704 = vmatpush1.bf16.xpose.msra.mxu0 0
    %1705 = vmatprep.subr.bf16.mxu0 0
    %1706 = vmatpush1.bf16.xpose.msra.mxu0 0
    %1707 = vmatprep.subr.bf16.mxu0 0
    %1708 = vmatpush1.bf16.xpose.msra.mxu0 0
    %1709 = vmatprep.subr.bf16.mxu0 0
    %1710 = vmatpush1.bf16.xpose.msra.mxu0 0
    %1711 = vmatprep.subr.bf16.mxu0 0
    %1712 = vmatpush1.bf16.xpose.msra.mxu0 0
    %1713 = vmatprep.subr.bf16.mxu0 0
    %1714 = vmatpush1.bf16.xpose.msra.mxu0 0
    %1715 = vmatprep.subr.bf16.mxu0 0
    %1716 = vmatpush1.bf16.xpose.msra.mxu0 0
    %1717 = vmatprep.subr.bf16.mxu0 0
    %1718 = vmatpush1.bf16.xpose.msra.mxu0 0
    %1719 = vmatprep.subr.bf16.mxu0 0
    %1720 = vmatpush1.bf16.xpose.msra.mxu0 0
    %1721 = vmatprep.subr.bf16.mxu0 0
    %1722 = vmatpush1.bf16.xpose.msra.mxu0 0
    %1723 = vmatprep.subr.bf16.mxu0 0
    %1724 = vmatpush1.bf16.xpose.msra.mxu0 0
    %1725 = vmatprep.mubr.bf16.mxu0 0
    %1726 = vmatmul.mubr.bf16.gmra.mrb[0].mxu0 %v1688
    %v1727 = vpop.f32.mrb[0].mxu0
    %v1728 = vadd.f32 0.0, %v1727
    %v1729 = vpop.f32.mrb[0].mxu0
    %v1730 = vpop.f32.mrb[0].mxu0
    %v1731 = vpop.f32.mrb[0].mxu0
    %1732 = vdwg.mxu0
    %v1733 = vsel %vm144, %v1678, -inf
    %1734 = vmax.xlane.f32.xlu0 %v1733
    %v1735 = vpop.xlane.xlu0 %1734
    %v1736 = vsel %vm144, %v1728, -inf
    %1737 = vmax.xlane.f32.xlu0 %v1736
    %v1738 = vpop.xlane.xlu0 %1737
    %v1739 = vsub.f32 %v1678, %v1735
    %v1740 = vsub.f32 %v1728, %v1738
    %v1741 = vmul.f32 %v1739, 1.442695
    %v1742 = vpow.pop %v1741
    %v1743 = vmul.f32 %v1740, 1.442695
    %v1744 = vpow.pop %v1743
    %v1745 = vsel %vm144, %v1742, 0.0
    %1746 = vadd.xlane.f32.xlu0 %v1745
    %v1747 = vpop.xlane.xlu0 %1746
    %v1748 = vsel %vm144, %v1744, 0.0
    %1749 = vadd.xlane.f32.xlu0 %v1748
    %v1750 = vpop.xlane.xlu0 %1749
    %v1751 = vrcp.pop %v1747
    %v1752 = vrcp.pop %v1750
    %v1753 = vmul.f32 %v1742, %v1751
    %v1754 = vmul.f32 %v1744, %v1752
    %v1755 = vpack.c.bf16 %v1753, %v1753
    %v1756 = vpack.c.bf16 %v1754, %v1754
    %1757 = vrot.lane.b32.xlu0 %v1193, 48
    %v1758 = vpop.permute.xlu0 %1757
    %v1760 = vsel %vm144, %v1755, 0
    %v1763 = vsel %vm269, %v1758, 0
    %1765 = vmatprep.subr.bf16.mxu0 0
    %1766 = vmatpush1.bf16.msra.mxu0 %v1763
    %1767 = vmatprep.subr.bf16.mxu0 0
    %1768 = vmatpush1.bf16.msra.mxu0 0
    %1769 = vmatprep.subr.bf16.mxu0 0
    %1770 = vmatpush1.bf16.msra.mxu0 0
    %1771 = vmatprep.subr.bf16.mxu0 0
    %1772 = vmatpush1.bf16.msra.mxu0 0
    %1773 = vmatprep.subr.bf16.mxu0 0
    %1774 = vmatpush1.bf16.msra.mxu0 0
    %1775 = vmatprep.subr.bf16.mxu0 0
    %1776 = vmatpush1.bf16.msra.mxu0 0
    %1777 = vmatprep.subr.bf16.mxu0 0
    %1778 = vmatpush1.bf16.msra.mxu0 0
    %1779 = vmatprep.subr.bf16.mxu0 0
    %1780 = vmatpush1.bf16.msra.mxu0 0
    %1781 = vmatprep.subr.bf16.mxu0 0
    %1782 = vmatpush1.bf16.msra.mxu0 0
    %1783 = vmatprep.subr.bf16.mxu0 0
    %1784 = vmatpush1.bf16.msra.mxu0 0
    %1785 = vmatprep.subr.bf16.mxu0 0
    %1786 = vmatpush1.bf16.msra.mxu0 0
    %1787 = vmatprep.subr.bf16.mxu0 0
    %1788 = vmatpush1.bf16.msra.mxu0 0
    %1789 = vmatprep.subr.bf16.mxu0 0
    %1790 = vmatpush1.bf16.msra.mxu0 0
    %1791 = vmatprep.subr.bf16.mxu0 0
    %1792 = vmatpush1.bf16.msra.mxu0 0
    %1793 = vmatprep.subr.bf16.mxu0 0
    %1794 = vmatpush1.bf16.msra.mxu0 0
    %1795 = vmatprep.subr.bf16.mxu0 0
    %1796 = vmatpush1.bf16.msra.mxu0 0
    %1797 = vmatprep.mubr.bf16.mxu0 0
    %1798 = vmatmul.mubr.bf16.gmra.mrb[0].mxu0 %v1760
    %v1799 = vpop.f32.mrb[0].mxu0
    %v1800 = vadd.f32 0.0, %v1799
    %v1801 = vpop.f32.mrb[0].mxu0
    %v1802 = vpop.f32.mrb[0].mxu0
    %v1803 = vpop.f32.mrb[0].mxu0
    %1804 = vdwg.mxu0
    %1805 = vrot.lane.b32.xlu0 %v1194, 48
    %v1806 = vpop.permute.xlu0 %1805
    %v1808 = vsel %vm144, %v1756, 0
    %v1811 = vsel %vm269, %v1806, 0
    %1813 = vmatprep.subr.bf16.mxu0 0
    %1814 = vmatpush1.bf16.msra.mxu0 %v1811
    %1815 = vmatprep.subr.bf16.mxu0 0
    %1816 = vmatpush1.bf16.msra.mxu0 0
    %1817 = vmatprep.subr.bf16.mxu0 0
    %1818 = vmatpush1.bf16.msra.mxu0 0
    %1819 = vmatprep.subr.bf16.mxu0 0
    %1820 = vmatpush1.bf16.msra.mxu0 0
    %1821 = vmatprep.subr.bf16.mxu0 0
    %1822 = vmatpush1.bf16.msra.mxu0 0
    %1823 = vmatprep.subr.bf16.mxu0 0
    %1824 = vmatpush1.bf16.msra.mxu0 0
    %1825 = vmatprep.subr.bf16.mxu0 0
    %1826 = vmatpush1.bf16.msra.mxu0 0
    %1827 = vmatprep.subr.bf16.mxu0 0
    %1828 = vmatpush1.bf16.msra.mxu0 0
    %1829 = vmatprep.subr.bf16.mxu0 0
    %1830 = vmatpush1.bf16.msra.mxu0 0
    %1831 = vmatprep.subr.bf16.mxu0 0
    %1832 = vmatpush1.bf16.msra.mxu0 0
    %1833 = vmatprep.subr.bf16.mxu0 0
    %1834 = vmatpush1.bf16.msra.mxu0 0
    %1835 = vmatprep.subr.bf16.mxu0 0
    %1836 = vmatpush1.bf16.msra.mxu0 0
    %1837 = vmatprep.subr.bf16.mxu0 0
    %1838 = vmatpush1.bf16.msra.mxu0 0
    %1839 = vmatprep.subr.bf16.mxu0 0
    %1840 = vmatpush1.bf16.msra.mxu0 0
    %1841 = vmatprep.subr.bf16.mxu0 0
    %1842 = vmatpush1.bf16.msra.mxu0 0
    %1843 = vmatprep.subr.bf16.mxu0 0
    %1844 = vmatpush1.bf16.msra.mxu0 0
    %1845 = vmatprep.mubr.bf16.mxu0 0
    %1846 = vmatmul.mubr.bf16.gmra.mrb[0].mxu0 %v1808
    %v1847 = vpop.f32.mrb[0].mxu0
    %v1848 = vadd.f32 0.0, %v1847
    %v1849 = vpop.f32.mrb[0].mxu0
    %v1850 = vpop.f32.mrb[0].mxu0
    %v1851 = vpop.f32.mrb[0].mxu0
    %1852 = vdwg.mxu0
    %1853 = vrot.lane.b32.xlu0 %v1193, 104
    %v1854 = vpop.permute.xlu0 %1853
    %1855 = vrot.lane.b32.xlu0 %v1193, 72
    %v1856 = vpop.permute.xlu0 %1855
    %v1858 = vsel %vm144, %v1854, 0
    %v1861 = vsel %vm144, %v1856, 0
    %1863 = vmatprep.subr.bf16.mxu0 0
    %1864 = vmatpush1.bf16.xpose.msra.mxu0 %v1861
    %1865 = vmatprep.subr.bf16.mxu0 0
    %1866 = vmatpush1.bf16.xpose.msra.mxu0 0
    %1867 = vmatprep.subr.bf16.mxu0 0
    %1868 = vmatpush1.bf16.xpose.msra.mxu0 0
    %1869 = vmatprep.subr.bf16.mxu0 0
    %1870 = vmatpush1.bf16.xpose.msra.mxu0 0
    %1871 = vmatprep.subr.bf16.mxu0 0
    %1872 = vmatpush1.bf16.xpose.msra.mxu0 0
    %1873 = vmatprep.subr.bf16.mxu0 0
    %1874 = vmatpush1.bf16.xpose.msra.mxu0 0
    %1875 = vmatprep.subr.bf16.mxu0 0
    %1876 = vmatpush1.bf16.xpose.msra.mxu0 0
    %1877 = vmatprep.subr.bf16.mxu0 0
    %1878 = vmatpush1.bf16.xpose.msra.mxu0 0
    %1879 = vmatprep.subr.bf16.mxu0 0
    %1880 = vmatpush1.bf16.xpose.msra.mxu0 0
    %1881 = vmatprep.subr.bf16.mxu0 0
    %1882 = vmatpush1.bf16.xpose.msra.mxu0 0
    %1883 = vmatprep.subr.bf16.mxu0 0
    %1884 = vmatpush1.bf16.xpose.msra.mxu0 0
    %1885 = vmatprep.subr.bf16.mxu0 0
    %1886 = vmatpush1.bf16.xpose.msra.mxu0 0
    %1887 = vmatprep.subr.bf16.mxu0 0
    %1888 = vmatpush1.bf16.xpose.msra.mxu0 0
    %1889 = vmatprep.subr.bf16.mxu0 0
    %1890 = vmatpush1.bf16.xpose.msra.mxu0 0
    %1891 = vmatprep.subr.bf16.mxu0 0
    %1892 = vmatpush1.bf16.xpose.msra.mxu0 0
    %1893 = vmatprep.subr.bf16.mxu0 0
    %1894 = vmatpush1.bf16.xpose.msra.mxu0 0
    %1895 = vmatprep.mubr.bf16.mxu0 0
    %1896 = vmatmul.mubr.bf16.gmra.mrb[0].mxu0 %v1858
    %v1897 = vpop.f32.mrb[0].mxu0
    %v1898 = vadd.f32 0.0, %v1897
    %v1899 = vpop.f32.mrb[0].mxu0
    %v1900 = vpop.f32.mrb[0].mxu0
    %v1901 = vpop.f32.mrb[0].mxu0
    %1902 = vdwg.mxu0
    %1903 = vrot.lane.b32.xlu0 %v1194, 104
    %v1904 = vpop.permute.xlu0 %1903
    %1905 = vrot.lane.b32.xlu0 %v1194, 72
    %v1906 = vpop.permute.xlu0 %1905
    %v1908 = vsel %vm144, %v1904, 0
    %v1911 = vsel %vm144, %v1906, 0
    %1913 = vmatprep.subr.bf16.mxu0 0
    %1914 = vmatpush1.bf16.xpose.msra.mxu0 %v1911
    %1915 = vmatprep.subr.bf16.mxu0 0
    %1916 = vmatpush1.bf16.xpose.msra.mxu0 0
    %1917 = vmatprep.subr.bf16.mxu0 0
    %1918 = vmatpush1.bf16.xpose.msra.mxu0 0
    %1919 = vmatprep.subr.bf16.mxu0 0
    %1920 = vmatpush1.bf16.xpose.msra.mxu0 0
    %1921 = vmatprep.subr.bf16.mxu0 0
    %1922 = vmatpush1.bf16.xpose.msra.mxu0 0
    %1923 = vmatprep.subr.bf16.mxu0 0
    %1924 = vmatpush1.bf16.xpose.msra.mxu0 0
    %1925 = vmatprep.subr.bf16.mxu0 0
    %1926 = vmatpush1.bf16.xpose.msra.mxu0 0
    %1927 = vmatprep.subr.bf16.mxu0 0
    %1928 = vmatpush1.bf16.xpose.msra.mxu0 0
    %1929 = vmatprep.subr.bf16.mxu0 0
    %1930 = vmatpush1.bf16.xpose.msra.mxu0 0
    %1931 = vmatprep.subr.bf16.mxu0 0
    %1932 = vmatpush1.bf16.xpose.msra.mxu0 0
    %1933 = vmatprep.subr.bf16.mxu0 0
    %1934 = vmatpush1.bf16.xpose.msra.mxu0 0
    %1935 = vmatprep.subr.bf16.mxu0 0
    %1936 = vmatpush1.bf16.xpose.msra.mxu0 0
    %1937 = vmatprep.subr.bf16.mxu0 0
    %1938 = vmatpush1.bf16.xpose.msra.mxu0 0
    %1939 = vmatprep.subr.bf16.mxu0 0
    %1940 = vmatpush1.bf16.xpose.msra.mxu0 0
    %1941 = vmatprep.subr.bf16.mxu0 0
    %1942 = vmatpush1.bf16.xpose.msra.mxu0 0
    %1943 = vmatprep.subr.bf16.mxu0 0
    %1944 = vmatpush1.bf16.xpose.msra.mxu0 0
    %1945 = vmatprep.mubr.bf16.mxu0 0
    %1946 = vmatmul.mubr.bf16.gmra.mrb[0].mxu0 %v1908
    %v1947 = vpop.f32.mrb[0].mxu0
    %v1948 = vadd.f32 0.0, %v1947
    %v1949 = vpop.f32.mrb[0].mxu0
    %v1950 = vpop.f32.mrb[0].mxu0
    %v1951 = vpop.f32.mrb[0].mxu0
    %1952 = vdwg.mxu0
    %v1953 = vsel %vm144, %v1898, -inf
    %1954 = vmax.xlane.f32.xlu0 %v1953
    %v1955 = vpop.xlane.xlu0 %1954
    %v1956 = vsel %vm144, %v1948, -inf
    %1957 = vmax.xlane.f32.xlu0 %v1956
    %v1958 = vpop.xlane.xlu0 %1957
    %v1959 = vsub.f32 %v1898, %v1955
    %v1960 = vsub.f32 %v1948, %v1958
    %v1961 = vmul.f32 %v1959, 1.442695
    %v1962 = vpow.pop %v1961
    %v1963 = vmul.f32 %v1960, 1.442695
    %v1964 = vpow.pop %v1963
    %v1965 = vsel %vm144, %v1962, 0.0
    %1966 = vadd.xlane.f32.xlu0 %v1965
    %v1967 = vpop.xlane.xlu0 %1966
    %v1968 = vsel %vm144, %v1964, 0.0
    %1969 = vadd.xlane.f32.xlu0 %v1968
    %v1970 = vpop.xlane.xlu0 %1969
    %v1971 = vrcp.pop %v1967
    %v1972 = vrcp.pop %v1970
    %v1973 = vmul.f32 %v1962, %v1971
    %v1974 = vmul.f32 %v1964, %v1972
    %v1975 = vpack.c.bf16 %v1973, %v1973
    %v1976 = vpack.c.bf16 %v1974, %v1974
    %1977 = vrot.lane.b32.xlu0 %v1193, 40
    %v1978 = vpop.permute.xlu0 %1977
    %v1980 = vsel %vm144, %v1975, 0
    %v1983 = vsel %vm269, %v1978, 0
    %1985 = vmatprep.subr.bf16.mxu0 0
    %1986 = vmatpush1.bf16.msra.mxu0 %v1983
    %1987 = vmatprep.subr.bf16.mxu0 0
    %1988 = vmatpush1.bf16.msra.mxu0 0
    %1989 = vmatprep.subr.bf16.mxu0 0
    %1990 = vmatpush1.bf16.msra.mxu0 0
    %1991 = vmatprep.subr.bf16.mxu0 0
    %1992 = vmatpush1.bf16.msra.mxu0 0
    %1993 = vmatprep.subr.bf16.mxu0 0
    %1994 = vmatpush1.bf16.msra.mxu0 0
    %1995 = vmatprep.subr.bf16.mxu0 0
    %1996 = vmatpush1.bf16.msra.mxu0 0
    %1997 = vmatprep.subr.bf16.mxu0 0
    %1998 = vmatpush1.bf16.msra.mxu0 0
    %1999 = vmatprep.subr.bf16.mxu0 0
    %2000 = vmatpush1.bf16.msra.mxu0 0
    %2001 = vmatprep.subr.bf16.mxu0 0
    %2002 = vmatpush1.bf16.msra.mxu0 0
    %2003 = vmatprep.subr.bf16.mxu0 0
    %2004 = vmatpush1.bf16.msra.mxu0 0
    %2005 = vmatprep.subr.bf16.mxu0 0
    %2006 = vmatpush1.bf16.msra.mxu0 0
    %2007 = vmatprep.subr.bf16.mxu0 0
    %2008 = vmatpush1.bf16.msra.mxu0 0
    %2009 = vmatprep.subr.bf16.mxu0 0
    %2010 = vmatpush1.bf16.msra.mxu0 0
    %2011 = vmatprep.subr.bf16.mxu0 0
    %2012 = vmatpush1.bf16.msra.mxu0 0
    %2013 = vmatprep.subr.bf16.mxu0 0
    %2014 = vmatpush1.bf16.msra.mxu0 0
    %2015 = vmatprep.subr.bf16.mxu0 0
    %2016 = vmatpush1.bf16.msra.mxu0 0
    %2017 = vmatprep.mubr.bf16.mxu0 0
    %2018 = vmatmul.mubr.bf16.gmra.mrb[0].mxu0 %v1980
    %v2019 = vpop.f32.mrb[0].mxu0
    %v2020 = vadd.f32 0.0, %v2019
    %v2021 = vpop.f32.mrb[0].mxu0
    %v2022 = vpop.f32.mrb[0].mxu0
    %v2023 = vpop.f32.mrb[0].mxu0
    %2024 = vdwg.mxu0
    %2025 = vrot.lane.b32.xlu0 %v1194, 40
    %v2026 = vpop.permute.xlu0 %2025
    %v2028 = vsel %vm144, %v1976, 0
    %v2031 = vsel %vm269, %v2026, 0
    %2033 = vmatprep.subr.bf16.mxu0 0
    %2034 = vmatpush1.bf16.msra.mxu0 %v2031
    %2035 = vmatprep.subr.bf16.mxu0 0
    %2036 = vmatpush1.bf16.msra.mxu0 0
    %2037 = vmatprep.subr.bf16.mxu0 0
    %2038 = vmatpush1.bf16.msra.mxu0 0
    %2039 = vmatprep.subr.bf16.mxu0 0
    %2040 = vmatpush1.bf16.msra.mxu0 0
    %2041 = vmatprep.subr.bf16.mxu0 0
    %2042 = vmatpush1.bf16.msra.mxu0 0
    %2043 = vmatprep.subr.bf16.mxu0 0
    %2044 = vmatpush1.bf16.msra.mxu0 0
    %2045 = vmatprep.subr.bf16.mxu0 0
    %2046 = vmatpush1.bf16.msra.mxu0 0
    %2047 = vmatprep.subr.bf16.mxu0 0
    %2048 = vmatpush1.bf16.msra.mxu0 0
    %2049 = vmatprep.subr.bf16.mxu0 0
    %2050 = vmatpush1.bf16.msra.mxu0 0
    %2051 = vmatprep.subr.bf16.mxu0 0
    %2052 = vmatpush1.bf16.msra.mxu0 0
    %2053 = vmatprep.subr.bf16.mxu0 0
    %2054 = vmatpush1.bf16.msra.mxu0 0
    %2055 = vmatprep.subr.bf16.mxu0 0
    %2056 = vmatpush1.bf16.msra.mxu0 0
    %2057 = vmatprep.subr.bf16.mxu0 0
    %2058 = vmatpush1.bf16.msra.mxu0 0
    %2059 = vmatprep.subr.bf16.mxu0 0
    %2060 = vmatpush1.bf16.msra.mxu0 0
    %2061 = vmatprep.subr.bf16.mxu0 0
    %2062 = vmatpush1.bf16.msra.mxu0 0
    %2063 = vmatprep.subr.bf16.mxu0 0
    %2064 = vmatpush1.bf16.msra.mxu0 0
    %2065 = vmatprep.mubr.bf16.mxu0 0
    %2066 = vmatmul.mubr.bf16.gmra.mrb[0].mxu0 %v2028
    %v2067 = vpop.f32.mrb[0].mxu0
    %v2068 = vadd.f32 0.0, %v2067
    %v2069 = vpop.f32.mrb[0].mxu0
    %v2070 = vpop.f32.mrb[0].mxu0
    %v2071 = vpop.f32.mrb[0].mxu0
    %2072 = vdwg.mxu0
    %2075 = vrot.lane.b32.xlu0 %v1580, 8
    %v2076 = vpop.permute.xlu0 %2075
    %2077 = vrot.lane.b32.xlu0 %v1628, 8
    %v2078 = vpop.permute.xlu0 %2077
    %2083 = vrot.lane.b32.xlu0 %v1800, 16
    %v2084 = vpop.permute.xlu0 %2083
    %2085 = vrot.lane.b32.xlu0 %v1848, 16
    %v2086 = vpop.permute.xlu0 %2085
    %2091 = vrot.lane.b32.xlu0 %v2020, 24
    %v2092 = vpop.permute.xlu0 %2091
    %2093 = vrot.lane.b32.xlu0 %v2068, 24
    %v2094 = vpop.permute.xlu0 %2093
    %v2097 = vsel %vm144, %v1360, %v2076
    %v2098 = vsel %vm144, %v1408, %v2078
    %v2099 = vsel %vm1047, %v2097, %v2084
    %v2100 = vsel %vm1047, %v2098, %v2086
    %v2101 = vsel %vm1050, %v2099, %v2092
    %v2102 = vsel %vm1050, %v2100, %v2094
    %v2103 = vpack.c.bf16 %v2102, %v2101
    %v2105 = vlaneseq
    %v2106 = vshrl.u32 %v2105, 7
    %v2107 = vsub.s32 0, %v2106
    %v2108 = vrot.slane %v1129, %v2107
    %v2114 = vunpack.c.l.b16 %v1124
    %v2115 = vunpack.c.l.b16 %v1125
    %v2116 = vunpack.c.l.b16 %v1126
    %v2117 = vunpack.c.l.b16 %v1127
    %v2118 = vpack.c.b16 %v2115, %v2114
    %v2119 = vpack.c.b16 %v2117, %v2116
    %v2123 = vsel %vm94, %v2103, 0
    %2125 = vmatprep.subr.bf16.mxu0 0
    %2126 = vmatpush1.bf16.msra.mxu0 %v2118
    %2127 = vmatprep.subr.bf16.mxu0 0
    %2128 = vmatpush1.bf16.msra.mxu0 %v2119
    %2129 = vmatprep.subr.bf16.mxu0 0
    %2130 = vmatpush1.bf16.msra.mxu0 0
    %2131 = vmatprep.subr.bf16.mxu0 0
    %2132 = vmatpush1.bf16.msra.mxu0 0
    %2133 = vmatprep.subr.bf16.mxu0 0
    %2134 = vmatpush1.bf16.msra.mxu0 0
    %2135 = vmatprep.subr.bf16.mxu0 0
    %2136 = vmatpush1.bf16.msra.mxu0 0
    %2137 = vmatprep.subr.bf16.mxu0 0
    %2138 = vmatpush1.bf16.msra.mxu0 0
    %2139 = vmatprep.subr.bf16.mxu0 0
    %2140 = vmatpush1.bf16.msra.mxu0 0
    %2141 = vmatprep.subr.bf16.mxu0 0
    %2142 = vmatpush1.bf16.msra.mxu0 0
    %2143 = vmatprep.subr.bf16.mxu0 0
    %2144 = vmatpush1.bf16.msra.mxu0 0
    %2145 = vmatprep.subr.bf16.mxu0 0
    %2146 = vmatpush1.bf16.msra.mxu0 0
    %2147 = vmatprep.subr.bf16.mxu0 0
    %2148 = vmatpush1.bf16.msra.mxu0 0
    %2149 = vmatprep.subr.bf16.mxu0 0
    %2150 = vmatpush1.bf16.msra.mxu0 0
    %2151 = vmatprep.subr.bf16.mxu0 0
    %2152 = vmatpush1.bf16.msra.mxu0 0
    %2153 = vmatprep.subr.bf16.mxu0 0
    %2154 = vmatpush1.bf16.msra.mxu0 0
    %2155 = vmatprep.subr.bf16.mxu0 0
    %2156 = vmatpush1.bf16.msra.mxu0 0
    %2157 = vmatprep.mubr.bf16.mxu0 0
    %2158 = vmatmul.mubr.bf16.gmra.mrb[0].mxu0 %v2123
    %v2159 = vpop.f32.mrb[0].mxu0
    %v2160 = vadd.f32 %v2108, %v2159
    %v2161 = vpop.f32.mrb[0].mxu0
    %v2162 = vpop.f32.mrb[0].mxu0
    %v2163 = vadd.f32 %v2108, %v2162
    %v2164 = vpop.f32.mrb[0].mxu0
    %2165 = vdwg.mxu0
    %2166 = vst.msk [vmem:[#allocation8] sm:$0xff] %vm94, %v2160
    %2167 = vst.msk [vmem:[#allocation8 + $0x8] sm:$0xff] %vm94, %v2163
    // Predicated region
    $region34: #{tpu_custom_call.1} parent=1 // pred_check
      _
    $region35: #{tpu_custom_call.1} parent=1 // pred_check_branch
      %2169 = sbr.rel (0) target = $region37
    $region36: #{tpu_custom_call.1} parent=1 // pred_region
      %s2171 = ssub.s32 256, 256
      %2172 = vsyncadd [#allocation4], %s2171
      %s2173 = sshll.u32 [#allocation8], 4
      %s2174 = int_to_ptr.vmem [resolvable:$true] %s2173
      %2179 = dma.vmem_to_hbm [thread:$0]  %s2174, 256, %s5, [#allocation4], 128, 128, 8
    $region37: #{tpu_custom_call.1} parent=1 // pred_fallthru
      _
    // Predicated region
    $region38: #{tpu_custom_call.1} parent=1 // pred_check
      _
    $region39: #{tpu_custom_call.1} parent=1 // pred_check_branch
      %2181 = sbr.rel (0) target = $region41
    $region40: #{tpu_custom_call.1} parent=1 // pred_region
      %2182 = dma.done [#allocation4], 256
    $region41: #{tpu_custom_call.1} parent=1 // pred_fallthru
      _
    %2183 = vsyncpa [#allocation3], 1
    %2184 = vsyncpa [#allocation6], 1
    %2185 = vsyncpa [#allocation4], 1

</llo_original>
